<compile_context>
chip_gen: v7x
topology: tpu7x:2x2x1
jax: 0.10.0
libtpu: 0.0.40
codegen_flags: <defaults>
</compile_context>

<pallas_src>
import math

import numpy as np
import jax
import jax.numpy as jnp
from jax import lax
from jax.experimental import pallas as pl
from jax.experimental.pallas import tpu as pltpu

# ---------------------------------------------------------------------------
# Module configuration (scaled-down but structurally identical to the
# defaults: max_sigma=10, min_sigma=1, sigma_bins=50, truncate=5 would give a
# 101x101 conv kernel, far larger than this small demo image).
# ---------------------------------------------------------------------------
MAX_SIGMA = 2.0
MIN_SIGMA = 1.0
SIGMA_BINS = 4
TRUNCATE = 2.0
FOOTPRINT = 3          # -> 3x3x3 max pool, padding 1, stride 1
THRESHOLD = 0.001

H = W = 16             # spatial size of the input image

# Derived parameters, mirroring DifferenceOfGaussiansStandardConv.__init__
SIGMA_LIST = np.concatenate(
    [np.linspace(MIN_SIGMA, MAX_SIGMA, SIGMA_BINS),
     [MAX_SIGMA + (MAX_SIGMA - MIN_SIGMA) / (SIGMA_BINS - 1)]])
S1 = SIGMA_BINS + 1                                   # pyramid levels
S = SIGMA_BINS                                        # DoG planes
RADII = tuple(int(TRUNCATE * s + 0.5) for s in SIGMA_LIST)   # true radii (2,3,3,4,5)
MAX_RADIUS = max(RADII)
K = 2 * MAX_RADIUS + 1                                # Conv2d kernel width


def gaussian_taps_1d(radius: int, sigma: float):
    """Normalized 1-D Gaussian taps; outer(t, t) == torch_gaussian_kernel(2r+1, sigma)."""
    x = np.arange(2 * radius + 1, dtype=np.float64)
    g = np.exp(-(((x - radius) / sigma) ** 2) / 2.0)
    g = g / g.sum()
    return tuple(float(v) for v in g)


# Compile-time constants baked into the kernel (the module's conv weights are
# a deterministic function of sigma/truncate).
TAPS = tuple(gaussian_taps_1d(RADII[i], float(SIGMA_LIST[i])) for i in range(S1))
DOG_SCALE = tuple(float(SIGMA_LIST[i]) for i in range(S))


def np_gaussian_kernel(width: int, sigma: float) -> np.ndarray:
    """Equivalent of torch_gaussian_kernel for dim=2 (used only by the reference)."""
    x = np.arange(width, dtype=np.float64)
    mean = (width - 1) / 2.0
    g = (1.0 / (sigma * math.sqrt(2.0 * math.pi))) * np.exp(
        -(((x - mean) / sigma) ** 2) / 2.0)
    k = np.outer(g, g)
    return k / k.sum()


def build_gaussian_pyramid_weights() -> np.ndarray:
    """(S1, K, K) weights: each per-sigma kernel zero-padded to KxK (reference only)."""
    w = np.zeros((S1, K, K), dtype=np.float64)
    for i, s in enumerate(SIGMA_LIST):
        radius = RADII[i]
        kern = np_gaussian_kernel(2 * radius + 1, float(s))
        pad = MAX_RADIUS - radius
        w[i, pad:K - pad, pad:K - pad] = kern
    return w.astype(np.float32)


# ---------------------------------------------------------------------------
# Pallas kernel: separable gaussian pyramid + DoG + separable 3x3x3 max-pool
# + peak mask, all fused in one kernel invocation.
# ---------------------------------------------------------------------------
def dog_kernel(xpad_ref, mask_ref, lm_ref, tmp_ref, mp_ref):
    # xpad_ref : (H+2R, W+2R) f32 zero-padded image (VMEM)
    # mask_ref : (S, H, W) i32 output (cast to bool outside)
    # lm_ref   : (S, H, W) f32 output (local maxima)
    # tmp_ref  : (H+2R, W)  f32 VMEM scratch, row-conv intermediate (reused per sigma)
    # mp_ref   : (H+2, W+2) f32 VMEM scratch, -inf bordered plane for separable 3x3 max
    R = MAX_RADIUS

    # ---- gaussian pyramid: separable conv, per-sigma true radius ------------
    gs = []
    for c in range(S1):
        r = RADII[c]
        taps = TAPS[c]
        off = R - r               # skip the zero padding the true radius never touches
        nrows = H + 2 * r

        # horizontal (lane-axis) pass over exactly the rows the vertical pass needs
        acc = taps[0] * xpad_ref[off:off + nrows, off:off + W]
        for j in range(1, 2 * r + 1):
            acc = acc + taps[j] * xpad_ref[off:off + nrows, off + j:off + j + W]
        tmp_ref[0:nrows, :] = acc

        # vertical (sublane-axis) pass
        g = taps[0] * tmp_ref[0:H, :]
        for j in range(1, 2 * r + 1):
            g = g + taps[j] * tmp_ref[j:j + H, :]
        gs.append(g)

    # ---- difference of gaussians, scaled by sigma (kept in registers) -------
    dogs = [(gs[i] - gs[i + 1]) * DOG_SCALE[i] for i in range(S)]

    # ---- separable 3x3 spatial max per plane (-inf padded borders) ----------
    # Border cells of mp_ref are written once and stay -inf; only the interior
    # is rewritten per plane.
    mp_ref[...] = jnp.full_like(mp_ref, -jnp.inf)
    smax = []
    for i in range(S):
        d = dogs[i]
        mp_ref[1:1 + H, 1:1 + W] = d
        mw = jnp.maximum(jnp.maximum(mp_ref[1:1 + H, 0:W], d),
                         mp_ref[1:1 + H, 2:2 + W])
        mp_ref[1:1 + H, 1:1 + W] = mw
        sm = jnp.maximum(jnp.maximum(mp_ref[0:H, 1:1 + W], mw),
                         mp_ref[2:2 + H, 1:1 + W])
        smax.append(sm)

    # ---- sigma-axis max (registers only) + peak mask -------------------------
    for i in range(S):
        lm = smax[i]
        if i > 0:
            lm = jnp.maximum(lm, smax[i - 1])
        if i < S - 1:
            lm = jnp.maximum(lm, smax[i + 1])
        lm_ref[i] = lm
        d = dogs[i]
        mask_ref[i] = ((lm == d) & (d > THRESHOLD)).astype(jnp.int32)


# ---------------------------------------------------------------------------
# Wrapper (glue: strip NCHW, zero-pad the conv input, cast mask to bool)
# ---------------------------------------------------------------------------
@jax.jit
def dog_forward(x):
    # x: (1, 1, H, W) float32 (NCHW, as in the PyTorch module)
    img = x[0, 0]
    xpad = jnp.pad(img, MAX_RADIUS)  # zero padding == Conv2d padding_mode='zeros'

    mask_i32, local_maxima = pl.pallas_call(
        dog_kernel,
        out_shape=(
            jax.ShapeDtypeStruct((S, H, W), jnp.int32),
            jax.ShapeDtypeStruct((S, H, W), jnp.float32),
        ),
        in_specs=[pl.BlockSpec(memory_space=pltpu.MemorySpace.VMEM)],
        out_specs=(
            pl.BlockSpec(memory_space=pltpu.MemorySpace.VMEM),
            pl.BlockSpec(memory_space=pltpu.MemorySpace.VMEM),
        ),
        scratch_shapes=[
            pltpu.VMEM((H + 2 * MAX_RADIUS, W), jnp.float32),
            pltpu.VMEM((H + 2, W + 2), jnp.float32),
        ],
    )(xpad)

    return mask_i32.astype(jnp.bool_), local_maxima


# Pure-JAX reference for a sanity check (not Pallas).
def reference_forward(x, w, sigmas):
    g = lax.conv_general_dilated(
        x, w.reshape(S1, 1, K, K),
        window_strides=(1, 1),
        padding=[(MAX_RADIUS, MAX_RADIUS)] * 2,
        dimension_numbers=("NCHW", "OIHW", "NCHW"),
        precision=lax.Precision.HIGHEST)[0]
    dog = (g[:-1] - g[1:]) * sigmas[:, None, None]
    lm = lax.reduce_window(dog, -jnp.inf, lax.max,
                           (3, 3, 3), (1, 1, 1),
                           padding=((1, 1), (1, 1), (1, 1)))
    mask = (lm == dog) & (dog > THRESHOLD)
    return mask, lm


if __name__ == "__main__":
    key = jax.random.PRNGKey(0)
    x = jax.random.normal(key, (1, 1, H, W), dtype=jnp.float32)

    mask, local_maxima = dog_forward(x)
    jax.block_until_ready((mask, local_maxima))

    # Light correctness check of the hot path against plain JAX/XLA (f32).
    w = build_gaussian_pyramid_weights()
    sigmas_s = jnp.asarray(SIGMA_LIST[:-1].astype(np.float32))
    _, lm_ref = reference_forward(x, jnp.asarray(w), sigmas_s)
    np.testing.assert_allclose(np.asarray(local_maxima), np.asarray(lm_ref),
                               rtol=1e-3, atol=1e-4)
    assert mask.shape == (S, H, W) and mask.dtype == jnp.bool_
    assert local_maxima.shape == (S, H, W) and local_maxima.dtype == jnp.float32

    print("KERNEL_OK")
</pallas_src>

<mosaic_0001>
module attributes {stable_mosaic.version = 11 : i64} {
  func.func @dog_kernel(%arg0: memref<26x26xf32, #tpu.memory_space<vmem>>, %arg1: memref<4x16x16xi32, #tpu.memory_space<vmem>>, %arg2: memref<4x16x16xf32, #tpu.memory_space<vmem>>, %arg3: memref<26x16xf32, #tpu.memory_space<vmem>>, %arg4: memref<18x18xf32, #tpu.memory_space<vmem>>) attributes {dimension_semantics = [], scalar_prefetch = 0 : i64, scratch_operands = 2 : i64, tpu.core_type = #tpu.core_type<tc>} {
    %c3 = arith.constant 3 : index
    %c3_0 = arith.constant 3 : index
    %0 = vector.load %arg0[%c3, %c3_0] : memref<26x26xf32, #tpu.memory_space<vmem>>, vector<20x16xf32>
    %cst = arith.constant 0.054488685 : f32
    %1 = vector.broadcast %cst : f32 to vector<20x16xf32>
    %2 = arith.mulf %1, %0 : vector<20x16xf32>
    %c3_1 = arith.constant 3 : index
    %c4 = arith.constant 4 : index
    %3 = vector.load %arg0[%c3_1, %c4] : memref<26x26xf32, #tpu.memory_space<vmem>>, vector<20x16xf32>
    %cst_2 = arith.constant 0.244201347 : f32
    %4 = vector.broadcast %cst_2 : f32 to vector<20x16xf32>
    %5 = arith.mulf %4, %3 : vector<20x16xf32>
    %6 = arith.addf %2, %5 : vector<20x16xf32>
    %c3_3 = arith.constant 3 : index
    %c5 = arith.constant 5 : index
    %7 = vector.load %arg0[%c3_3, %c5] : memref<26x26xf32, #tpu.memory_space<vmem>>, vector<20x16xf32>
    %cst_4 = arith.constant 0.402619958 : f32
    %8 = vector.broadcast %cst_4 : f32 to vector<20x16xf32>
    %9 = arith.mulf %8, %7 : vector<20x16xf32>
    %10 = arith.addf %6, %9 : vector<20x16xf32>
    %c3_5 = arith.constant 3 : index
    %c6 = arith.constant 6 : index
    %11 = vector.load %arg0[%c3_5, %c6] : memref<26x26xf32, #tpu.memory_space<vmem>>, vector<20x16xf32>
    %cst_6 = arith.constant 0.244201347 : f32
    %12 = vector.broadcast %cst_6 : f32 to vector<20x16xf32>
    %13 = arith.mulf %12, %11 : vector<20x16xf32>
    %14 = arith.addf %10, %13 : vector<20x16xf32>
    %c3_7 = arith.constant 3 : index
    %c7 = arith.constant 7 : index
    %15 = vector.load %arg0[%c3_7, %c7] : memref<26x26xf32, #tpu.memory_space<vmem>>, vector<20x16xf32>
    %cst_8 = arith.constant 0.054488685 : f32
    %16 = vector.broadcast %cst_8 : f32 to vector<20x16xf32>
    %17 = arith.mulf %16, %15 : vector<20x16xf32>
    %18 = arith.addf %14, %17 : vector<20x16xf32>
    %c0 = arith.constant 0 : index
    %c0_9 = arith.constant 0 : index
    %19 = vector.load %arg3[%c0, %c0_9] : memref<26x16xf32, #tpu.memory_space<vmem>>, vector<20x16xf32>
    tpu.vector_store %arg3[%c0, %c0_9], %18 {strides = array<i32>} : memref<26x16xf32, #tpu.memory_space<vmem>>, vector<20x16xf32>,
    %c0_10 = arith.constant 0 : index
    %c0_11 = arith.constant 0 : index
    %20 = vector.load %arg3[%c0_10, %c0_11] : memref<26x16xf32, #tpu.memory_space<vmem>>, vector<16x16xf32>
    %cst_12 = arith.constant 0.054488685 : f32
    %21 = vector.broadcast %cst_12 : f32 to vector<16x16xf32>
    %22 = arith.mulf %21, %20 : vector<16x16xf32>
    %c1 = arith.constant 1 : index
    %c0_13 = arith.constant 0 : index
    %23 = vector.load %arg3[%c1, %c0_13] : memref<26x16xf32, #tpu.memory_space<vmem>>, vector<16x16xf32>
    %cst_14 = arith.constant 0.244201347 : f32
    %24 = vector.broadcast %cst_14 : f32 to vector<16x16xf32>
    %25 = arith.mulf %24, %23 : vector<16x16xf32>
    %26 = arith.addf %22, %25 : vector<16x16xf32>
    %c2 = arith.constant 2 : index
    %c0_15 = arith.constant 0 : index
    %27 = vector.load %arg3[%c2, %c0_15] : memref<26x16xf32, #tpu.memory_space<vmem>>, vector<16x16xf32>
    %cst_16 = arith.constant 0.402619958 : f32
    %28 = vector.broadcast %cst_16 : f32 to vector<16x16xf32>
    %29 = arith.mulf %28, %27 : vector<16x16xf32>
    %30 = arith.addf %26, %29 : vector<16x16xf32>
    %c3_17 = arith.constant 3 : index
    %c0_18 = arith.constant 0 : index
    %31 = vector.load %arg3[%c3_17, %c0_18] : memref<26x16xf32, #tpu.memory_space<vmem>>, vector<16x16xf32>
    %cst_19 = arith.constant 0.244201347 : f32
    %32 = vector.broadcast %cst_19 : f32 to vector<16x16xf32>
    %33 = arith.mulf %32, %31 : vector<16x16xf32>
    %34 = arith.addf %30, %33 : vector<16x16xf32>
    %c4_20 = arith.constant 4 : index
    %c0_21 = arith.constant 0 : index
    %35 = vector.load %arg3[%c4_20, %c0_21] : memref<26x16xf32, #tpu.memory_space<vmem>>, vector<16x16xf32>
    %cst_22 = arith.constant 0.054488685 : f32
    %36 = vector.broadcast %cst_22 : f32 to vector<16x16xf32>
    %37 = arith.mulf %36, %35 : vector<16x16xf32>
    %38 = arith.addf %34, %37 : vector<16x16xf32>
    %c2_23 = arith.constant 2 : index
    %c2_24 = arith.constant 2 : index
    %39 = vector.load %arg0[%c2_23, %c2_24] : memref<26x26xf32, #tpu.memory_space<vmem>>, vector<22x16xf32>
    %cst_25 = arith.constant 0.0239774063 : f32
    %40 = vector.broadcast %cst_25 : f32 to vector<22x16xf32>
    %41 = arith.mulf %40, %39 : vector<22x16xf32>
    %c2_26 = arith.constant 2 : index
    %c3_27 = arith.constant 3 : index
    %42 = vector.load %arg0[%c2_26, %c3_27] : memref<26x26xf32, #tpu.memory_space<vmem>>, vector<22x16xf32>
    %cst_28 = arith.constant 0.0978427901 : f32
    %43 = vector.broadcast %cst_28 : f32 to vector<22x16xf32>
    %44 = arith.mulf %43, %42 : vector<22x16xf32>
    %45 = arith.addf %41, %44 : vector<22x16xf32>
    %c2_29 = arith.constant 2 : index
    %c4_30 = arith.constant 4 : index
    %46 = vector.load %arg0[%c2_29, %c4_30] : memref<26x26xf32, #tpu.memory_space<vmem>>, vector<22x16xf32>
    %cst_31 = arith.constant 0.227491304 : f32
    %47 = vector.broadcast %cst_31 : f32 to vector<22x16xf32>
    %48 = arith.mulf %47, %46 : vector<22x16xf32>
    %49 = arith.addf %45, %48 : vector<22x16xf32>
    %c2_32 = arith.constant 2 : index
    %c5_33 = arith.constant 5 : index
    %50 = vector.load %arg0[%c2_32, %c5_33] : memref<26x26xf32, #tpu.memory_space<vmem>>, vector<22x16xf32>
    %cst_34 = arith.constant 3.013770e-01 : f32
    %51 = vector.broadcast %cst_34 : f32 to vector<22x16xf32>
    %52 = arith.mulf %51, %50 : vector<22x16xf32>
    %53 = arith.addf %49, %52 : vector<22x16xf32>
    %c2_35 = arith.constant 2 : index
    %c6_36 = arith.constant 6 : index
    %54 = vector.load %arg0[%c2_35, %c6_36] : memref<26x26xf32, #tpu.memory_space<vmem>>, vector<22x16xf32>
    %cst_37 = arith.constant 0.227491304 : f32
    %55 = vector.broadcast %cst_37 : f32 to vector<22x16xf32>
    %56 = arith.mulf %55, %54 : vector<22x16xf32>
    %57 = arith.addf %53, %56 : vector<22x16xf32>
    %c2_38 = arith.constant 2 : index
    %c7_39 = arith.constant 7 : index
    %58 = vector.load %arg0[%c2_38, %c7_39] : memref<26x26xf32, #tpu.memory_space<vmem>>, vector<22x16xf32>
    %cst_40 = arith.constant 0.0978427901 : f32
    %59 = vector.broadcast %cst_40 : f32 to vector<22x16xf32>
    %60 = arith.mulf %59, %58 : vector<22x16xf32>
    %61 = arith.addf %57, %60 : vector<22x16xf32>
    %c2_41 = arith.constant 2 : index
    %c8 = arith.constant 8 : index
    %62 = vector.load %arg0[%c2_41, %c8] : memref<26x26xf32, #tpu.memory_space<vmem>>, vector<22x16xf32>
    %cst_42 = arith.constant 0.0239774063 : f32
    %63 = vector.broadcast %cst_42 : f32 to vector<22x16xf32>
    %64 = arith.mulf %63, %62 : vector<22x16xf32>
    %65 = arith.addf %61, %64 : vector<22x16xf32>
    %c0_43 = arith.constant 0 : index
    %c0_44 = arith.constant 0 : index
    %66 = vector.load %arg3[%c0_43, %c0_44] : memref<26x16xf32, #tpu.memory_space<vmem>>, vector<22x16xf32>
    tpu.vector_store %arg3[%c0_43, %c0_44], %65 {strides = array<i32>} : memref<26x16xf32, #tpu.memory_space<vmem>>, vector<22x16xf32>,
    %c0_45 = arith.constant 0 : index
    %c0_46 = arith.constant 0 : index
    %67 = vector.load %arg3[%c0_45, %c0_46] : memref<26x16xf32, #tpu.memory_space<vmem>>, vector<16x16xf32>
    %cst_47 = arith.constant 0.0239774063 : f32
    %68 = vector.broadcast %cst_47 : f32 to vector<16x16xf32>
    %69 = arith.mulf %68, %67 : vector<16x16xf32>
    %c1_48 = arith.constant 1 : index
    %c0_49 = arith.constant 0 : index
    %70 = vector.load %arg3[%c1_48, %c0_49] : memref<26x16xf32, #tpu.memory_space<vmem>>, vector<16x16xf32>
    %cst_50 = arith.constant 0.0978427901 : f32
    %71 = vector.broadcast %cst_50 : f32 to vector<16x16xf32>
    %72 = arith.mulf %71, %70 : vector<16x16xf32>
    %73 = arith.addf %69, %72 : vector<16x16xf32>
    %c2_51 = arith.constant 2 : index
    %c0_52 = arith.constant 0 : index
    %74 = vector.load %arg3[%c2_51, %c0_52] : memref<26x16xf32, #tpu.memory_space<vmem>>, vector<16x16xf32>
    %cst_53 = arith.constant 0.227491304 : f32
    %75 = vector.broadcast %cst_53 : f32 to vector<16x16xf32>
    %76 = arith.mulf %75, %74 : vector<16x16xf32>
    %77 = arith.addf %73, %76 : vector<16x16xf32>
    %c3_54 = arith.constant 3 : index
    %c0_55 = arith.constant 0 : index
    %78 = vector.load %arg3[%c3_54, %c0_55] : memref<26x16xf32, #tpu.memory_space<vmem>>, vector<16x16xf32>
    %cst_56 = arith.constant 3.013770e-01 : f32
    %79 = vector.broadcast %cst_56 : f32 to vector<16x16xf32>
    %80 = arith.mulf %79, %78 : vector<16x16xf32>
    %81 = arith.addf %77, %80 : vector<16x16xf32>
    %c4_57 = arith.constant 4 : index
    %c0_58 = arith.constant 0 : index
    %82 = vector.load %arg3[%c4_57, %c0_58] : memref<26x16xf32, #tpu.memory_space<vmem>>, vector<16x16xf32>
    %cst_59 = arith.constant 0.227491304 : f32
    %83 = vector.broadcast %cst_59 : f32 to vector<16x16xf32>
    %84 = arith.mulf %83, %82 : vector<16x16xf32>
    %85 = arith.addf %81, %84 : vector<16x16xf32>
    %c5_60 = arith.constant 5 : index
    %c0_61 = arith.constant 0 : index
    %86 = vector.load %arg3[%c5_60, %c0_61] : memref<26x16xf32, #tpu.memory_space<vmem>>, vector<16x16xf32>
    %cst_62 = arith.constant 0.0978427901 : f32
    %87 = vector.broadcast %cst_62 : f32 to vector<16x16xf32>
    %88 = arith.mulf %87, %86 : vector<16x16xf32>
    %89 = arith.addf %85, %88 : vector<16x16xf32>
    %c6_63 = arith.constant 6 : index
    %c0_64 = arith.constant 0 : index
    %90 = vector.load %arg3[%c6_63, %c0_64] : memref<26x16xf32, #tpu.memory_space<vmem>>, vector<16x16xf32>
    %cst_65 = arith.constant 0.0239774063 : f32
    %91 = vector.broadcast %cst_65 : f32 to vector<16x16xf32>
    %92 = arith.mulf %91, %90 : vector<16x16xf32>
    %93 = arith.addf %89, %92 : vector<16x16xf32>
    %c2_66 = arith.constant 2 : index
    %c2_67 = arith.constant 2 : index
    %94 = vector.load %arg0[%c2_66, %c2_67] : memref<26x26xf32, #tpu.memory_space<vmem>>, vector<22x16xf32>
    %cst_68 = arith.constant 0.0489867367 : f32
    %95 = vector.broadcast %cst_68 : f32 to vector<22x16xf32>
    %96 = arith.mulf %95, %94 : vector<22x16xf32>
    %c2_69 = arith.constant 2 : index
    %c3_70 = arith.constant 3 : index
    %97 = vector.load %arg0[%c2_69, %c3_70] : memref<26x26xf32, #tpu.memory_space<vmem>>, vector<22x16xf32>
    %cst_71 = arith.constant 0.120487936 : f32
    %98 = vector.broadcast %cst_71 : f32 to vector<22x16xf32>
    %99 = arith.mulf %98, %97 : vector<22x16xf32>
    %100 = arith.addf %96, %99 : vector<22x16xf32>
    %c2_72 = arith.constant 2 : index
    %c4_73 = arith.constant 4 : index
    %101 = vector.load %arg0[%c2_72, %c4_73] : memref<26x26xf32, #tpu.memory_space<vmem>>, vector<22x16xf32>
    %cst_74 = arith.constant 0.206758127 : f32
    %102 = vector.broadcast %cst_74 : f32 to vector<22x16xf32>
    %103 = arith.mulf %102, %101 : vector<22x16xf32>
    %104 = arith.addf %100, %103 : vector<22x16xf32>
    %c2_75 = arith.constant 2 : index
    %c5_76 = arith.constant 5 : index
    %105 = vector.load %arg0[%c2_75, %c5_76] : memref<26x26xf32, #tpu.memory_space<vmem>>, vector<22x16xf32>
    %cst_77 = arith.constant 0.247534409 : f32
    %106 = vector.broadcast %cst_77 : f32 to vector<22x16xf32>
    %107 = arith.mulf %106, %105 : vector<22x16xf32>
    %108 = arith.addf %104, %107 : vector<22x16xf32>
    %c2_78 = arith.constant 2 : index
    %c6_79 = arith.constant 6 : index
    %109 = vector.load %arg0[%c2_78, %c6_79] : memref<26x26xf32, #tpu.memory_space<vmem>>, vector<22x16xf32>
    %cst_80 = arith.constant 0.206758127 : f32
    %110 = vector.broadcast %cst_80 : f32 to vector<22x16xf32>
    %111 = arith.mulf %110, %109 : vector<22x16xf32>
    %112 = arith.addf %108, %111 : vector<22x16xf32>
    %c2_81 = arith.constant 2 : index
    %c7_82 = arith.constant 7 : index
    %113 = vector.load %arg0[%c2_81, %c7_82] : memref<26x26xf32, #tpu.memory_space<vmem>>, vector<22x16xf32>
    %cst_83 = arith.constant 0.120487936 : f32
    %114 = vector.broadcast %cst_83 : f32 to vector<22x16xf32>
    %115 = arith.mulf %114, %113 : vector<22x16xf32>
    %116 = arith.addf %112, %115 : vector<22x16xf32>
    %c2_84 = arith.constant 2 : index
    %c8_85 = arith.constant 8 : index
    %117 = vector.load %arg0[%c2_84, %c8_85] : memref<26x26xf32, #tpu.memory_space<vmem>>, vector<22x16xf32>
    %cst_86 = arith.constant 0.0489867367 : f32
    %118 = vector.broadcast %cst_86 : f32 to vector<22x16xf32>
    %119 = arith.mulf %118, %117 : vector<22x16xf32>
    %120 = arith.addf %116, %119 : vector<22x16xf32>
    %c0_87 = arith.constant 0 : index
    %c0_88 = arith.constant 0 : index
    %121 = vector.load %arg3[%c0_87, %c0_88] : memref<26x16xf32, #tpu.memory_space<vmem>>, vector<22x16xf32>
    tpu.vector_store %arg3[%c0_87, %c0_88], %120 {strides = array<i32>} : memref<26x16xf32, #tpu.memory_space<vmem>>, vector<22x16xf32>,
    %c0_89 = arith.constant 0 : index
    %c0_90 = arith.constant 0 : index
    %122 = vector.load %arg3[%c0_89, %c0_90] : memref<26x16xf32, #tpu.memory_space<vmem>>, vector<16x16xf32>
    %cst_91 = arith.constant 0.0489867367 : f32
    %123 = vector.broadcast %cst_91 : f32 to vector<16x16xf32>
    %124 = arith.mulf %123, %122 : vector<16x16xf32>
    %c1_92 = arith.constant 1 : index
    %c0_93 = arith.constant 0 : index
    %125 = vector.load %arg3[%c1_92, %c0_93] : memref<26x16xf32, #tpu.memory_space<vmem>>, vector<16x16xf32>
    %cst_94 = arith.constant 0.120487936 : f32
    %126 = vector.broadcast %cst_94 : f32 to vector<16x16xf32>
    %127 = arith.mulf %126, %125 : vector<16x16xf32>
    %128 = arith.addf %124, %127 : vector<16x16xf32>
    %c2_95 = arith.constant 2 : index
    %c0_96 = arith.constant 0 : index
    %129 = vector.load %arg3[%c2_95, %c0_96] : memref<26x16xf32, #tpu.memory_space<vmem>>, vector<16x16xf32>
    %cst_97 = arith.constant 0.206758127 : f32
    %130 = vector.broadcast %cst_97 : f32 to vector<16x16xf32>
    %131 = arith.mulf %130, %129 : vector<16x16xf32>
    %132 = arith.addf %128, %131 : vector<16x16xf32>
    %c3_98 = arith.constant 3 : index
    %c0_99 = arith.constant 0 : index
    %133 = vector.load %arg3[%c3_98, %c0_99] : memref<26x16xf32, #tpu.memory_space<vmem>>, vector<16x16xf32>
    %cst_100 = arith.constant 0.247534409 : f32
    %134 = vector.broadcast %cst_100 : f32 to vector<16x16xf32>
    %135 = arith.mulf %134, %133 : vector<16x16xf32>
    %136 = arith.addf %132, %135 : vector<16x16xf32>
    %c4_101 = arith.constant 4 : index
    %c0_102 = arith.constant 0 : index
    %137 = vector.load %arg3[%c4_101, %c0_102] : memref<26x16xf32, #tpu.memory_space<vmem>>, vector<16x16xf32>
    %cst_103 = arith.constant 0.206758127 : f32
    %138 = vector.broadcast %cst_103 : f32 to vector<16x16xf32>
    %139 = arith.mulf %138, %137 : vector<16x16xf32>
    %140 = arith.addf %136, %139 : vector<16x16xf32>
    %c5_104 = arith.constant 5 : index
    %c0_105 = arith.constant 0 : index
    %141 = vector.load %arg3[%c5_104, %c0_105] : memref<26x16xf32, #tpu.memory_space<vmem>>, vector<16x16xf32>
    %cst_106 = arith.constant 0.120487936 : f32
    %142 = vector.broadcast %cst_106 : f32 to vector<16x16xf32>
    %143 = arith.mulf %142, %141 : vector<16x16xf32>
    %144 = arith.addf %140, %143 : vector<16x16xf32>
    %c6_107 = arith.constant 6 : index
    %c0_108 = arith.constant 0 : index
    %145 = vector.load %arg3[%c6_107, %c0_108] : memref<26x16xf32, #tpu.memory_space<vmem>>, vector<16x16xf32>
    %cst_109 = arith.constant 0.0489867367 : f32
    %146 = vector.broadcast %cst_109 : f32 to vector<16x16xf32>
    %147 = arith.mulf %146, %145 : vector<16x16xf32>
    %148 = arith.addf %144, %147 : vector<16x16xf32>
    %c1_110 = arith.constant 1 : index
    %c1_111 = arith.constant 1 : index
    %149 = vector.load %arg0[%c1_110, %c1_111] : memref<26x26xf32, #tpu.memory_space<vmem>>, vector<24x16xf32>
    %cst_112 = arith.constant 0.0276305508 : f32
    %150 = vector.broadcast %cst_112 : f32 to vector<24x16xf32>
    %151 = arith.mulf %150, %149 : vector<24x16xf32>
    %c1_113 = arith.constant 1 : index
    %c2_114 = arith.constant 2 : index
    %152 = vector.load %arg0[%c1_113, %c2_114] : memref<26x26xf32, #tpu.memory_space<vmem>>, vector<24x16xf32>
    %cst_115 = arith.constant 0.0662822425 : f32
    %153 = vector.broadcast %cst_115 : f32 to vector<24x16xf32>
    %154 = arith.mulf %153, %152 : vector<24x16xf32>
    %155 = arith.addf %151, %154 : vector<24x16xf32>
    %c1_116 = arith.constant 1 : index
    %c3_117 = arith.constant 3 : index
    %156 = vector.load %arg0[%c1_116, %c3_117] : memref<26x26xf32, #tpu.memory_space<vmem>>, vector<24x16xf32>
    %cst_118 = arith.constant 0.12383154 : f32
    %157 = vector.broadcast %cst_118 : f32 to vector<24x16xf32>
    %158 = arith.mulf %157, %156 : vector<24x16xf32>
    %159 = arith.addf %155, %158 : vector<24x16xf32>
    %c1_119 = arith.constant 1 : index
    %c4_120 = arith.constant 4 : index
    %160 = vector.load %arg0[%c1_119, %c4_120] : memref<26x26xf32, #tpu.memory_space<vmem>>, vector<24x16xf32>
    %cst_121 = arith.constant 0.180173829 : f32
    %161 = vector.broadcast %cst_121 : f32 to vector<24x16xf32>
    %162 = arith.mulf %161, %160 : vector<24x16xf32>
    %163 = arith.addf %159, %162 : vector<24x16xf32>
    %c1_122 = arith.constant 1 : index
    %c5_123 = arith.constant 5 : index
    %164 = vector.load %arg0[%c1_122, %c5_123] : memref<26x26xf32, #tpu.memory_space<vmem>>, vector<24x16xf32>
    %cst_124 = arith.constant 0.204163685 : f32
    %165 = vector.broadcast %cst_124 : f32 to vector<24x16xf32>
    %166 = arith.mulf %165, %164 : vector<24x16xf32>
    %167 = arith.addf %163, %166 : vector<24x16xf32>
    %c1_125 = arith.constant 1 : index
    %c6_126 = arith.constant 6 : index
    %168 = vector.load %arg0[%c1_125, %c6_126] : memref<26x26xf32, #tpu.memory_space<vmem>>, vector<24x16xf32>
    %cst_127 = arith.constant 0.180173829 : f32
    %169 = vector.broadcast %cst_127 : f32 to vector<24x16xf32>
    %170 = arith.mulf %169, %168 : vector<24x16xf32>
    %171 = arith.addf %167, %170 : vector<24x16xf32>
    %c1_128 = arith.constant 1 : index
    %c7_129 = arith.constant 7 : index
    %172 = vector.load %arg0[%c1_128, %c7_129] : memref<26x26xf32, #tpu.memory_space<vmem>>, vector<24x16xf32>
    %cst_130 = arith.constant 0.12383154 : f32
    %173 = vector.broadcast %cst_130 : f32 to vector<24x16xf32>
    %174 = arith.mulf %173, %172 : vector<24x16xf32>
    %175 = arith.addf %171, %174 : vector<24x16xf32>
    %c1_131 = arith.constant 1 : index
    %c8_132 = arith.constant 8 : index
    %176 = vector.load %arg0[%c1_131, %c8_132] : memref<26x26xf32, #tpu.memory_space<vmem>>, vector<24x16xf32>
    %cst_133 = arith.constant 0.0662822425 : f32
    %177 = vector.broadcast %cst_133 : f32 to vector<24x16xf32>
    %178 = arith.mulf %177, %176 : vector<24x16xf32>
    %179 = arith.addf %175, %178 : vector<24x16xf32>
    %c1_134 = arith.constant 1 : index
    %c9 = arith.constant 9 : index
    %180 = vector.load %arg0[%c1_134, %c9] : memref<26x26xf32, #tpu.memory_space<vmem>>, vector<24x16xf32>
    %cst_135 = arith.constant 0.0276305508 : f32
    %181 = vector.broadcast %cst_135 : f32 to vector<24x16xf32>
    %182 = arith.mulf %181, %180 : vector<24x16xf32>
    %183 = arith.addf %179, %182 : vector<24x16xf32>
    %c0_136 = arith.constant 0 : index
    %c0_137 = arith.constant 0 : index
    %184 = vector.load %arg3[%c0_136, %c0_137] : memref<26x16xf32, #tpu.memory_space<vmem>>, vector<24x16xf32>
    tpu.vector_store %arg3[%c0_136, %c0_137], %183 {strides = array<i32>} : memref<26x16xf32, #tpu.memory_space<vmem>>, vector<24x16xf32>,
    %c0_138 = arith.constant 0 : index
    %c0_139 = arith.constant 0 : index
    %185 = vector.load %arg3[%c0_138, %c0_139] : memref<26x16xf32, #tpu.memory_space<vmem>>, vector<16x16xf32>
    %cst_140 = arith.constant 0.0276305508 : f32
    %186 = vector.broadcast %cst_140 : f32 to vector<16x16xf32>
    %187 = arith.mulf %186, %185 : vector<16x16xf32>
    %c1_141 = arith.constant 1 : index
    %c0_142 = arith.constant 0 : index
    %188 = vector.load %arg3[%c1_141, %c0_142] : memref<26x16xf32, #tpu.memory_space<vmem>>, vector<16x16xf32>
    %cst_143 = arith.constant 0.0662822425 : f32
    %189 = vector.broadcast %cst_143 : f32 to vector<16x16xf32>
    %190 = arith.mulf %189, %188 : vector<16x16xf32>
    %191 = arith.addf %187, %190 : vector<16x16xf32>
    %c2_144 = arith.constant 2 : index
    %c0_145 = arith.constant 0 : index
    %192 = vector.load %arg3[%c2_144, %c0_145] : memref<26x16xf32, #tpu.memory_space<vmem>>, vector<16x16xf32>
    %cst_146 = arith.constant 0.12383154 : f32
    %193 = vector.broadcast %cst_146 : f32 to vector<16x16xf32>
    %194 = arith.mulf %193, %192 : vector<16x16xf32>
    %195 = arith.addf %191, %194 : vector<16x16xf32>
    %c3_147 = arith.constant 3 : index
    %c0_148 = arith.constant 0 : index
    %196 = vector.load %arg3[%c3_147, %c0_148] : memref<26x16xf32, #tpu.memory_space<vmem>>, vector<16x16xf32>
    %cst_149 = arith.constant 0.180173829 : f32
    %197 = vector.broadcast %cst_149 : f32 to vector<16x16xf32>
    %198 = arith.mulf %197, %196 : vector<16x16xf32>
    %199 = arith.addf %195, %198 : vector<16x16xf32>
    %c4_150 = arith.constant 4 : index
    %c0_151 = arith.constant 0 : index
    %200 = vector.load %arg3[%c4_150, %c0_151] : memref<26x16xf32, #tpu.memory_space<vmem>>, vector<16x16xf32>
    %cst_152 = arith.constant 0.204163685 : f32
    %201 = vector.broadcast %cst_152 : f32 to vector<16x16xf32>
    %202 = arith.mulf %201, %200 : vector<16x16xf32>
    %203 = arith.addf %199, %202 : vector<16x16xf32>
    %c5_153 = arith.constant 5 : index
    %c0_154 = arith.constant 0 : index
    %204 = vector.load %arg3[%c5_153, %c0_154] : memref<26x16xf32, #tpu.memory_space<vmem>>, vector<16x16xf32>
    %cst_155 = arith.constant 0.180173829 : f32
    %205 = vector.broadcast %cst_155 : f32 to vector<16x16xf32>
    %206 = arith.mulf %205, %204 : vector<16x16xf32>
    %207 = arith.addf %203, %206 : vector<16x16xf32>
    %c6_156 = arith.constant 6 : index
    %c0_157 = arith.constant 0 : index
    %208 = vector.load %arg3[%c6_156, %c0_157] : memref<26x16xf32, #tpu.memory_space<vmem>>, vector<16x16xf32>
    %cst_158 = arith.constant 0.12383154 : f32
    %209 = vector.broadcast %cst_158 : f32 to vector<16x16xf32>
    %210 = arith.mulf %209, %208 : vector<16x16xf32>
    %211 = arith.addf %207, %210 : vector<16x16xf32>
    %c7_159 = arith.constant 7 : index
    %c0_160 = arith.constant 0 : index
    %212 = vector.load %arg3[%c7_159, %c0_160] : memref<26x16xf32, #tpu.memory_space<vmem>>, vector<16x16xf32>
    %cst_161 = arith.constant 0.0662822425 : f32
    %213 = vector.broadcast %cst_161 : f32 to vector<16x16xf32>
    %214 = arith.mulf %213, %212 : vector<16x16xf32>
    %215 = arith.addf %211, %214 : vector<16x16xf32>
    %c8_162 = arith.constant 8 : index
    %c0_163 = arith.constant 0 : index
    %216 = vector.load %arg3[%c8_162, %c0_163] : memref<26x16xf32, #tpu.memory_space<vmem>>, vector<16x16xf32>
    %cst_164 = arith.constant 0.0276305508 : f32
    %217 = vector.broadcast %cst_164 : f32 to vector<16x16xf32>
    %218 = arith.mulf %217, %216 : vector<16x16xf32>
    %219 = arith.addf %215, %218 : vector<16x16xf32>
    %c0_165 = arith.constant 0 : index
    %c0_166 = arith.constant 0 : index
    %220 = vector.load %arg0[%c0_165, %c0_166] : memref<26x26xf32, #tpu.memory_space<vmem>>, vector<26x16xf32>
    %cst_167 = arith.constant 0.0175190698 : f32
    %221 = vector.broadcast %cst_167 : f32 to vector<26x16xf32>
    %222 = arith.mulf %221, %220 : vector<26x16xf32>
    %c0_168 = arith.constant 0 : index
    %c1_169 = arith.constant 1 : index
    %223 = vector.load %arg0[%c0_168, %c1_169] : memref<26x26xf32, #tpu.memory_space<vmem>>, vector<26x16xf32>
    %cst_170 = arith.constant 0.0400376655 : f32
    %224 = vector.broadcast %cst_170 : f32 to vector<26x16xf32>
    %225 = arith.mulf %224, %223 : vector<26x16xf32>
    %226 = arith.addf %222, %225 : vector<26x16xf32>
    %c0_171 = arith.constant 0 : index
    %c2_172 = arith.constant 2 : index
    %227 = vector.load %arg0[%c0_171, %c2_172] : memref<26x26xf32, #tpu.memory_space<vmem>>, vector<26x16xf32>
    %cst_173 = arith.constant 0.0761479214 : f32
    %228 = vector.broadcast %cst_173 : f32 to vector<26x16xf32>
    %229 = arith.mulf %228, %227 : vector<26x16xf32>
    %230 = arith.addf %226, %229 : vector<26x16xf32>
    %c0_174 = arith.constant 0 : index
    %c3_175 = arith.constant 3 : index
    %231 = vector.load %arg0[%c0_174, %c3_175] : memref<26x26xf32, #tpu.memory_space<vmem>>, vector<26x16xf32>
    %cst_176 = arith.constant 0.120525509 : f32
    %232 = vector.broadcast %cst_176 : f32 to vector<26x16xf32>
    %233 = arith.mulf %232, %231 : vector<26x16xf32>
    %234 = arith.addf %230, %233 : vector<26x16xf32>
    %c0_177 = arith.constant 0 : index
    %c4_178 = arith.constant 4 : index
    %235 = vector.load %arg0[%c0_177, %c4_178] : memref<26x26xf32, #tpu.memory_space<vmem>>, vector<26x16xf32>
    %cst_179 = arith.constant 0.158756509 : f32
    %236 = vector.broadcast %cst_179 : f32 to vector<26x16xf32>
    %237 = arith.mulf %236, %235 : vector<26x16xf32>
    %238 = arith.addf %234, %237 : vector<26x16xf32>
    %c0_180 = arith.constant 0 : index
    %c5_181 = arith.constant 5 : index
    %239 = vector.load %arg0[%c0_180, %c5_181] : memref<26x26xf32, #tpu.memory_space<vmem>>, vector<26x16xf32>
    %cst_182 = arith.constant 0.174026638 : f32
    %240 = vector.broadcast %cst_182 : f32 to vector<26x16xf32>
    %241 = arith.mulf %240, %239 : vector<26x16xf32>
    %242 = arith.addf %238, %241 : vector<26x16xf32>
    %c0_183 = arith.constant 0 : index
    %c6_184 = arith.constant 6 : index
    %243 = vector.load %arg0[%c0_183, %c6_184] : memref<26x26xf32, #tpu.memory_space<vmem>>, vector<26x16xf32>
    %cst_185 = arith.constant 0.158756509 : f32
    %244 = vector.broadcast %cst_185 : f32 to vector<26x16xf32>
    %245 = arith.mulf %244, %243 : vector<26x16xf32>
    %246 = arith.addf %242, %245 : vector<26x16xf32>
    %c0_186 = arith.constant 0 : index
    %c7_187 = arith.constant 7 : index
    %247 = vector.load %arg0[%c0_186, %c7_187] : memref<26x26xf32, #tpu.memory_space<vmem>>, vector<26x16xf32>
    %cst_188 = arith.constant 0.120525509 : f32
    %248 = vector.broadcast %cst_188 : f32 to vector<26x16xf32>
    %249 = arith.mulf %248, %247 : vector<26x16xf32>
    %250 = arith.addf %246, %249 : vector<26x16xf32>
    %c0_189 = arith.constant 0 : index
    %c8_190 = arith.constant 8 : index
    %251 = vector.load %arg0[%c0_189, %c8_190] : memref<26x26xf32, #tpu.memory_space<vmem>>, vector<26x16xf32>
    %cst_191 = arith.constant 0.0761479214 : f32
    %252 = vector.broadcast %cst_191 : f32 to vector<26x16xf32>
    %253 = arith.mulf %252, %251 : vector<26x16xf32>
    %254 = arith.addf %250, %253 : vector<26x16xf32>
    %c0_192 = arith.constant 0 : index
    %c9_193 = arith.constant 9 : index
    %255 = vector.load %arg0[%c0_192, %c9_193] : memref<26x26xf32, #tpu.memory_space<vmem>>, vector<26x16xf32>
    %cst_194 = arith.constant 0.0400376655 : f32
    %256 = vector.broadcast %cst_194 : f32 to vector<26x16xf32>
    %257 = arith.mulf %256, %255 : vector<26x16xf32>
    %258 = arith.addf %254, %257 : vector<26x16xf32>
    %c0_195 = arith.constant 0 : index
    %c10 = arith.constant 10 : index
    %259 = vector.load %arg0[%c0_195, %c10] : memref<26x26xf32, #tpu.memory_space<vmem>>, vector<26x16xf32>
    %cst_196 = arith.constant 0.0175190698 : f32
    %260 = vector.broadcast %cst_196 : f32 to vector<26x16xf32>
    %261 = arith.mulf %260, %259 : vector<26x16xf32>
    %262 = arith.addf %258, %261 : vector<26x16xf32>
    %c0_197 = arith.constant 0 : index
    %c0_198 = arith.constant 0 : index
    %263 = vector.load %arg3[%c0_197, %c0_198] : memref<26x16xf32, #tpu.memory_space<vmem>>, vector<26x16xf32>
    tpu.vector_store %arg3[%c0_197, %c0_198], %262 {strides = array<i32>} : memref<26x16xf32, #tpu.memory_space<vmem>>, vector<26x16xf32>,
    %c0_199 = arith.constant 0 : index
    %c0_200 = arith.constant 0 : index
    %264 = vector.load %arg3[%c0_199, %c0_200] : memref<26x16xf32, #tpu.memory_space<vmem>>, vector<16x16xf32>
    %cst_201 = arith.constant 0.0175190698 : f32
    %265 = vector.broadcast %cst_201 : f32 to vector<16x16xf32>
    %266 = arith.mulf %265, %264 : vector<16x16xf32>
    %c1_202 = arith.constant 1 : index
    %c0_203 = arith.constant 0 : index
    %267 = vector.load %arg3[%c1_202, %c0_203] : memref<26x16xf32, #tpu.memory_space<vmem>>, vector<16x16xf32>
    %cst_204 = arith.constant 0.0400376655 : f32
    %268 = vector.broadcast %cst_204 : f32 to vector<16x16xf32>
    %269 = arith.mulf %268, %267 : vector<16x16xf32>
    %270 = arith.addf %266, %269 : vector<16x16xf32>
    %c2_205 = arith.constant 2 : index
    %c0_206 = arith.constant 0 : index
    %271 = vector.load %arg3[%c2_205, %c0_206] : memref<26x16xf32, #tpu.memory_space<vmem>>, vector<16x16xf32>
    %cst_207 = arith.constant 0.0761479214 : f32
    %272 = vector.broadcast %cst_207 : f32 to vector<16x16xf32>
    %273 = arith.mulf %272, %271 : vector<16x16xf32>
    %274 = arith.addf %270, %273 : vector<16x16xf32>
    %c3_208 = arith.constant 3 : index
    %c0_209 = arith.constant 0 : index
    %275 = vector.load %arg3[%c3_208, %c0_209] : memref<26x16xf32, #tpu.memory_space<vmem>>, vector<16x16xf32>
    %cst_210 = arith.constant 0.120525509 : f32
    %276 = vector.broadcast %cst_210 : f32 to vector<16x16xf32>
    %277 = arith.mulf %276, %275 : vector<16x16xf32>
    %278 = arith.addf %274, %277 : vector<16x16xf32>
    %c4_211 = arith.constant 4 : index
    %c0_212 = arith.constant 0 : index
    %279 = vector.load %arg3[%c4_211, %c0_212] : memref<26x16xf32, #tpu.memory_space<vmem>>, vector<16x16xf32>
    %cst_213 = arith.constant 0.158756509 : f32
    %280 = vector.broadcast %cst_213 : f32 to vector<16x16xf32>
    %281 = arith.mulf %280, %279 : vector<16x16xf32>
    %282 = arith.addf %278, %281 : vector<16x16xf32>
    %c5_214 = arith.constant 5 : index
    %c0_215 = arith.constant 0 : index
    %283 = vector.load %arg3[%c5_214, %c0_215] : memref<26x16xf32, #tpu.memory_space<vmem>>, vector<16x16xf32>
    %cst_216 = arith.constant 0.174026638 : f32
    %284 = vector.broadcast %cst_216 : f32 to vector<16x16xf32>
    %285 = arith.mulf %284, %283 : vector<16x16xf32>
    %286 = arith.addf %282, %285 : vector<16x16xf32>
    %c6_217 = arith.constant 6 : index
    %c0_218 = arith.constant 0 : index
    %287 = vector.load %arg3[%c6_217, %c0_218] : memref<26x16xf32, #tpu.memory_space<vmem>>, vector<16x16xf32>
    %cst_219 = arith.constant 0.158756509 : f32
    %288 = vector.broadcast %cst_219 : f32 to vector<16x16xf32>
    %289 = arith.mulf %288, %287 : vector<16x16xf32>
    %290 = arith.addf %286, %289 : vector<16x16xf32>
    %c7_220 = arith.constant 7 : index
    %c0_221 = arith.constant 0 : index
    %291 = vector.load %arg3[%c7_220, %c0_221] : memref<26x16xf32, #tpu.memory_space<vmem>>, vector<16x16xf32>
    %cst_222 = arith.constant 0.120525509 : f32
    %292 = vector.broadcast %cst_222 : f32 to vector<16x16xf32>
    %293 = arith.mulf %292, %291 : vector<16x16xf32>
    %294 = arith.addf %290, %293 : vector<16x16xf32>
    %c8_223 = arith.constant 8 : index
    %c0_224 = arith.constant 0 : index
    %295 = vector.load %arg3[%c8_223, %c0_224] : memref<26x16xf32, #tpu.memory_space<vmem>>, vector<16x16xf32>
    %cst_225 = arith.constant 0.0761479214 : f32
    %296 = vector.broadcast %cst_225 : f32 to vector<16x16xf32>
    %297 = arith.mulf %296, %295 : vector<16x16xf32>
    %298 = arith.addf %294, %297 : vector<16x16xf32>
    %c9_226 = arith.constant 9 : index
    %c0_227 = arith.constant 0 : index
    %299 = vector.load %arg3[%c9_226, %c0_227] : memref<26x16xf32, #tpu.memory_space<vmem>>, vector<16x16xf32>
    %cst_228 = arith.constant 0.0400376655 : f32
    %300 = vector.broadcast %cst_228 : f32 to vector<16x16xf32>
    %301 = arith.mulf %300, %299 : vector<16x16xf32>
    %302 = arith.addf %298, %301 : vector<16x16xf32>
    %c10_229 = arith.constant 10 : index
    %c0_230 = arith.constant 0 : index
    %303 = vector.load %arg3[%c10_229, %c0_230] : memref<26x16xf32, #tpu.memory_space<vmem>>, vector<16x16xf32>
    %cst_231 = arith.constant 0.0175190698 : f32
    %304 = vector.broadcast %cst_231 : f32 to vector<16x16xf32>
    %305 = arith.mulf %304, %303 : vector<16x16xf32>
    %306 = arith.addf %302, %305 : vector<16x16xf32>
    %307 = arith.subf %38, %93 : vector<16x16xf32>
    %cst_232 = arith.constant 1.000000e+00 : f32
    %308 = vector.broadcast %cst_232 : f32 to vector<16x16xf32>
    %309 = arith.mulf %307, %308 : vector<16x16xf32>
    %310 = arith.subf %93, %148 : vector<16x16xf32>
    %cst_233 = arith.constant 1.33333337 : f32
    %311 = vector.broadcast %cst_233 : f32 to vector<16x16xf32>
    %312 = arith.mulf %310, %311 : vector<16x16xf32>
    %313 = arith.subf %148, %219 : vector<16x16xf32>
    %cst_234 = arith.constant 1.66666663 : f32
    %314 = vector.broadcast %cst_234 : f32 to vector<16x16xf32>
    %315 = arith.mulf %313, %314 : vector<16x16xf32>
    %316 = arith.subf %219, %306 : vector<16x16xf32>
    %cst_235 = arith.constant 2.000000e+00 : f32
    %317 = vector.broadcast %cst_235 : f32 to vector<16x16xf32>
    %318 = arith.mulf %316, %317 : vector<16x16xf32>
    %cst_236 = arith.constant 0xFF800000 : f32
    %319 = vector.broadcast %cst_236 : f32 to vector<18x18xf32>
    %c0_237 = arith.constant 0 : index
    %c0_238 = arith.constant 0 : index
    %320 = vector.load %arg4[%c0_237, %c0_238] : memref<18x18xf32, #tpu.memory_space<vmem>>, vector<18x18xf32>
    tpu.vector_store %arg4[%c0_237, %c0_238], %319 {strides = array<i32>} : memref<18x18xf32, #tpu.memory_space<vmem>>, vector<18x18xf32>,
    %c1_239 = arith.constant 1 : index
    %c1_240 = arith.constant 1 : index
    %321 = vector.load %arg4[%c1_239, %c1_240] : memref<18x18xf32, #tpu.memory_space<vmem>>, vector<16x16xf32>
    tpu.vector_store %arg4[%c1_239, %c1_240], %309 {strides = array<i32>} : memref<18x18xf32, #tpu.memory_space<vmem>>, vector<16x16xf32>,
    %c1_241 = arith.constant 1 : index
    %c0_242 = arith.constant 0 : index
    %322 = vector.load %arg4[%c1_241, %c0_242] : memref<18x18xf32, #tpu.memory_space<vmem>>, vector<16x16xf32>
    %323 = arith.maximumf %322, %309 : vector<16x16xf32>
    %c1_243 = arith.constant 1 : index
    %c2_244 = arith.constant 2 : index
    %324 = vector.load %arg4[%c1_243, %c2_244] : memref<18x18xf32, #tpu.memory_space<vmem>>, vector<16x16xf32>
    %325 = arith.maximumf %323, %324 : vector<16x16xf32>
    %c1_245 = arith.constant 1 : index
    %c1_246 = arith.constant 1 : index
    %326 = vector.load %arg4[%c1_245, %c1_246] : memref<18x18xf32, #tpu.memory_space<vmem>>, vector<16x16xf32>
    tpu.vector_store %arg4[%c1_245, %c1_246], %325 {strides = array<i32>} : memref<18x18xf32, #tpu.memory_space<vmem>>, vector<16x16xf32>,
    %c0_247 = arith.constant 0 : index
    %c1_248 = arith.constant 1 : index
    %327 = vector.load %arg4[%c0_247, %c1_248] : memref<18x18xf32, #tpu.memory_space<vmem>>, vector<16x16xf32>
    %328 = arith.maximumf %327, %325 : vector<16x16xf32>
    %c2_249 = arith.constant 2 : index
    %c1_250 = arith.constant 1 : index
    %329 = vector.load %arg4[%c2_249, %c1_250] : memref<18x18xf32, #tpu.memory_space<vmem>>, vector<16x16xf32>
    %330 = arith.maximumf %328, %329 : vector<16x16xf32>
    %c1_251 = arith.constant 1 : index
    %c1_252 = arith.constant 1 : index
    %331 = vector.load %arg4[%c1_251, %c1_252] : memref<18x18xf32, #tpu.memory_space<vmem>>, vector<16x16xf32>
    tpu.vector_store %arg4[%c1_251, %c1_252], %312 {strides = array<i32>} : memref<18x18xf32, #tpu.memory_space<vmem>>, vector<16x16xf32>,
    %c1_253 = arith.constant 1 : index
    %c0_254 = arith.constant 0 : index
    %332 = vector.load %arg4[%c1_253, %c0_254] : memref<18x18xf32, #tpu.memory_space<vmem>>, vector<16x16xf32>
    %333 = arith.maximumf %332, %312 : vector<16x16xf32>
    %c1_255 = arith.constant 1 : index
    %c2_256 = arith.constant 2 : index
    %334 = vector.load %arg4[%c1_255, %c2_256] : memref<18x18xf32, #tpu.memory_space<vmem>>, vector<16x16xf32>
    %335 = arith.maximumf %333, %334 : vector<16x16xf32>
    %c1_257 = arith.constant 1 : index
    %c1_258 = arith.constant 1 : index
    %336 = vector.load %arg4[%c1_257, %c1_258] : memref<18x18xf32, #tpu.memory_space<vmem>>, vector<16x16xf32>
    tpu.vector_store %arg4[%c1_257, %c1_258], %335 {strides = array<i32>} : memref<18x18xf32, #tpu.memory_space<vmem>>, vector<16x16xf32>,
    %c0_259 = arith.constant 0 : index
    %c1_260 = arith.constant 1 : index
    %337 = vector.load %arg4[%c0_259, %c1_260] : memref<18x18xf32, #tpu.memory_space<vmem>>, vector<16x16xf32>
    %338 = arith.maximumf %337, %335 : vector<16x16xf32>
    %c2_261 = arith.constant 2 : index
    %c1_262 = arith.constant 1 : index
    %339 = vector.load %arg4[%c2_261, %c1_262] : memref<18x18xf32, #tpu.memory_space<vmem>>, vector<16x16xf32>
    %340 = arith.maximumf %338, %339 : vector<16x16xf32>
    %c1_263 = arith.constant 1 : index
    %c1_264 = arith.constant 1 : index
    %341 = vector.load %arg4[%c1_263, %c1_264] : memref<18x18xf32, #tpu.memory_space<vmem>>, vector<16x16xf32>
    tpu.vector_store %arg4[%c1_263, %c1_264], %315 {strides = array<i32>} : memref<18x18xf32, #tpu.memory_space<vmem>>, vector<16x16xf32>,
    %c1_265 = arith.constant 1 : index
    %c0_266 = arith.constant 0 : index
    %342 = vector.load %arg4[%c1_265, %c0_266] : memref<18x18xf32, #tpu.memory_space<vmem>>, vector<16x16xf32>
    %343 = arith.maximumf %342, %315 : vector<16x16xf32>
    %c1_267 = arith.constant 1 : index
    %c2_268 = arith.constant 2 : index
    %344 = vector.load %arg4[%c1_267, %c2_268] : memref<18x18xf32, #tpu.memory_space<vmem>>, vector<16x16xf32>
    %345 = arith.maximumf %343, %344 : vector<16x16xf32>
    %c1_269 = arith.constant 1 : index
    %c1_270 = arith.constant 1 : index
    %346 = vector.load %arg4[%c1_269, %c1_270] : memref<18x18xf32, #tpu.memory_space<vmem>>, vector<16x16xf32>
    tpu.vector_store %arg4[%c1_269, %c1_270], %345 {strides = array<i32>} : memref<18x18xf32, #tpu.memory_space<vmem>>, vector<16x16xf32>,
    %c0_271 = arith.constant 0 : index
    %c1_272 = arith.constant 1 : index
    %347 = vector.load %arg4[%c0_271, %c1_272] : memref<18x18xf32, #tpu.memory_space<vmem>>, vector<16x16xf32>
    %348 = arith.maximumf %347, %345 : vector<16x16xf32>
    %c2_273 = arith.constant 2 : index
    %c1_274 = arith.constant 1 : index
    %349 = vector.load %arg4[%c2_273, %c1_274] : memref<18x18xf32, #tpu.memory_space<vmem>>, vector<16x16xf32>
    %350 = arith.maximumf %348, %349 : vector<16x16xf32>
    %c1_275 = arith.constant 1 : index
    %c1_276 = arith.constant 1 : index
    %351 = vector.load %arg4[%c1_275, %c1_276] : memref<18x18xf32, #tpu.memory_space<vmem>>, vector<16x16xf32>
    tpu.vector_store %arg4[%c1_275, %c1_276], %318 {strides = array<i32>} : memref<18x18xf32, #tpu.memory_space<vmem>>, vector<16x16xf32>,
    %c1_277 = arith.constant 1 : index
    %c0_278 = arith.constant 0 : index
    %352 = vector.load %arg4[%c1_277, %c0_278] : memref<18x18xf32, #tpu.memory_space<vmem>>, vector<16x16xf32>
    %353 = arith.maximumf %352, %318 : vector<16x16xf32>
    %c1_279 = arith.constant 1 : index
    %c2_280 = arith.constant 2 : index
    %354 = vector.load %arg4[%c1_279, %c2_280] : memref<18x18xf32, #tpu.memory_space<vmem>>, vector<16x16xf32>
    %355 = arith.maximumf %353, %354 : vector<16x16xf32>
    %c1_281 = arith.constant 1 : index
    %c1_282 = arith.constant 1 : index
    %356 = vector.load %arg4[%c1_281, %c1_282] : memref<18x18xf32, #tpu.memory_space<vmem>>, vector<16x16xf32>
    tpu.vector_store %arg4[%c1_281, %c1_282], %355 {strides = array<i32>} : memref<18x18xf32, #tpu.memory_space<vmem>>, vector<16x16xf32>,
    %c0_283 = arith.constant 0 : index
    %c1_284 = arith.constant 1 : index
    %357 = vector.load %arg4[%c0_283, %c1_284] : memref<18x18xf32, #tpu.memory_space<vmem>>, vector<16x16xf32>
    %358 = arith.maximumf %357, %355 : vector<16x16xf32>
    %c2_285 = arith.constant 2 : index
    %c1_286 = arith.constant 1 : index
    %359 = vector.load %arg4[%c2_285, %c1_286] : memref<18x18xf32, #tpu.memory_space<vmem>>, vector<16x16xf32>
    %360 = arith.maximumf %358, %359 : vector<16x16xf32>
    %361 = arith.maximumf %330, %340 : vector<16x16xf32>
    %c0_287 = arith.constant 0 : index
    %c0_288 = arith.constant 0 : index
    %c0_289 = arith.constant 0 : index
    %362 = vector.load %arg2[%c0_287, %c0_288, %c0_289] : memref<4x16x16xf32, #tpu.memory_space<vmem>>, vector<1x16x16xf32>
    %363 = vector.shape_cast %362 : vector<1x16x16xf32> to vector<16x16xf32>
    %364 = vector.shape_cast %361 : vector<16x16xf32> to vector<1x16x16xf32>
    tpu.vector_store %arg2[%c0_287, %c0_288, %c0_289], %364 {strides = array<i32>} : memref<4x16x16xf32, #tpu.memory_space<vmem>>, vector<1x16x16xf32>,
    %365 = arith.cmpf oeq, %361, %309 : vector<16x16xf32>
    %cst_290 = arith.constant 1.000000e-03 : f32
    %366 = vector.broadcast %cst_290 : f32 to vector<16x16xf32>
    %367 = arith.cmpf ogt, %309, %366 : vector<16x16xf32>
    %368 = arith.andi %365, %367 : vector<16x16xi1>
    %369 = arith.extui %368 : vector<16x16xi1> to vector<16x16xi32>
    %c0_291 = arith.constant 0 : index
    %c0_292 = arith.constant 0 : index
    %c0_293 = arith.constant 0 : index
    %370 = vector.load %arg1[%c0_291, %c0_292, %c0_293] : memref<4x16x16xi32, #tpu.memory_space<vmem>>, vector<1x16x16xi32>
    %371 = vector.shape_cast %370 : vector<1x16x16xi32> to vector<16x16xi32>
    %372 = vector.shape_cast %369 : vector<16x16xi32> to vector<1x16x16xi32>
    tpu.vector_store %arg1[%c0_291, %c0_292, %c0_293], %372 {strides = array<i32>} : memref<4x16x16xi32, #tpu.memory_space<vmem>>, vector<1x16x16xi32>,
    %373 = arith.maximumf %340, %330 : vector<16x16xf32>
    %374 = arith.maximumf %373, %350 : vector<16x16xf32>
    %c1_294 = arith.constant 1 : index
    %c0_295 = arith.constant 0 : index
    %c0_296 = arith.constant 0 : index
    %375 = vector.load %arg2[%c1_294, %c0_295, %c0_296] : memref<4x16x16xf32, #tpu.memory_space<vmem>>, vector<1x16x16xf32>
    %376 = vector.shape_cast %375 : vector<1x16x16xf32> to vector<16x16xf32>
    %377 = vector.shape_cast %374 : vector<16x16xf32> to vector<1x16x16xf32>
    tpu.vector_store %arg2[%c1_294, %c0_295, %c0_296], %377 {strides = array<i32>} : memref<4x16x16xf32, #tpu.memory_space<vmem>>, vector<1x16x16xf32>,
    %378 = arith.cmpf oeq, %374, %312 : vector<16x16xf32>
    %cst_297 = arith.constant 1.000000e-03 : f32
    %379 = vector.broadcast %cst_297 : f32 to vector<16x16xf32>
    %380 = arith.cmpf ogt, %312, %379 : vector<16x16xf32>
    %381 = arith.andi %378, %380 : vector<16x16xi1>
    %382 = arith.extui %381 : vector<16x16xi1> to vector<16x16xi32>
    %c1_298 = arith.constant 1 : index
    %c0_299 = arith.constant 0 : index
    %c0_300 = arith.constant 0 : index
    %383 = vector.load %arg1[%c1_298, %c0_299, %c0_300] : memref<4x16x16xi32, #tpu.memory_space<vmem>>, vector<1x16x16xi32>
    %384 = vector.shape_cast %383 : vector<1x16x16xi32> to vector<16x16xi32>
    %385 = vector.shape_cast %382 : vector<16x16xi32> to vector<1x16x16xi32>
    tpu.vector_store %arg1[%c1_298, %c0_299, %c0_300], %385 {strides = array<i32>} : memref<4x16x16xi32, #tpu.memory_space<vmem>>, vector<1x16x16xi32>,
    %386 = arith.maximumf %350, %340 : vector<16x16xf32>
    %387 = arith.maximumf %386, %360 : vector<16x16xf32>
    %c2_301 = arith.constant 2 : index
    %c0_302 = arith.constant 0 : index
    %c0_303 = arith.constant 0 : index
    %388 = vector.load %arg2[%c2_301, %c0_302, %c0_303] : memref<4x16x16xf32, #tpu.memory_space<vmem>>, vector<1x16x16xf32>
    %389 = vector.shape_cast %388 : vector<1x16x16xf32> to vector<16x16xf32>
    %390 = vector.shape_cast %387 : vector<16x16xf32> to vector<1x16x16xf32>
    tpu.vector_store %arg2[%c2_301, %c0_302, %c0_303], %390 {strides = array<i32>} : memref<4x16x16xf32, #tpu.memory_space<vmem>>, vector<1x16x16xf32>,
    %391 = arith.cmpf oeq, %387, %315 : vector<16x16xf32>
    %cst_304 = arith.constant 1.000000e-03 : f32
    %392 = vector.broadcast %cst_304 : f32 to vector<16x16xf32>
    %393 = arith.cmpf ogt, %315, %392 : vector<16x16xf32>
    %394 = arith.andi %391, %393 : vector<16x16xi1>
    %395 = arith.extui %394 : vector<16x16xi1> to vector<16x16xi32>
    %c2_305 = arith.constant 2 : index
    %c0_306 = arith.constant 0 : index
    %c0_307 = arith.constant 0 : index
    %396 = vector.load %arg1[%c2_305, %c0_306, %c0_307] : memref<4x16x16xi32, #tpu.memory_space<vmem>>, vector<1x16x16xi32>
    %397 = vector.shape_cast %396 : vector<1x16x16xi32> to vector<16x16xi32>
    %398 = vector.shape_cast %395 : vector<16x16xi32> to vector<1x16x16xi32>
    tpu.vector_store %arg1[%c2_305, %c0_306, %c0_307], %398 {strides = array<i32>} : memref<4x16x16xi32, #tpu.memory_space<vmem>>, vector<1x16x16xi32>,
    %399 = arith.maximumf %360, %350 : vector<16x16xf32>
    %c3_308 = arith.constant 3 : index
    %c0_309 = arith.constant 0 : index
    %c0_310 = arith.constant 0 : index
    %400 = vector.load %arg2[%c3_308, %c0_309, %c0_310] : memref<4x16x16xf32, #tpu.memory_space<vmem>>, vector<1x16x16xf32>
    %401 = vector.shape_cast %400 : vector<1x16x16xf32> to vector<16x16xf32>
    %402 = vector.shape_cast %399 : vector<16x16xf32> to vector<1x16x16xf32>
    tpu.vector_store %arg2[%c3_308, %c0_309, %c0_310], %402 {strides = array<i32>} : memref<4x16x16xf32, #tpu.memory_space<vmem>>, vector<1x16x16xf32>,
    %403 = arith.cmpf oeq, %399, %318 : vector<16x16xf32>
    %cst_311 = arith.constant 1.000000e-03 : f32
    %404 = vector.broadcast %cst_311 : f32 to vector<16x16xf32>
    %405 = arith.cmpf ogt, %318, %404 : vector<16x16xf32>
    %406 = arith.andi %403, %405 : vector<16x16xi1>
    %407 = arith.extui %406 : vector<16x16xi1> to vector<16x16xi32>
    %c3_312 = arith.constant 3 : index
    %c0_313 = arith.constant 0 : index
    %c0_314 = arith.constant 0 : index
    %408 = vector.load %arg1[%c3_312, %c0_313, %c0_314] : memref<4x16x16xi32, #tpu.memory_space<vmem>>, vector<1x16x16xi32>
    %409 = vector.shape_cast %408 : vector<1x16x16xi32> to vector<16x16xi32>
    %410 = vector.shape_cast %407 : vector<16x16xi32> to vector<1x16x16xi32>
    tpu.vector_store %arg1[%c3_312, %c0_313, %c0_314], %410 {strides = array<i32>} : memref<4x16x16xi32, #tpu.memory_space<vmem>>, vector<1x16x16xi32>,
    return
  }
}

</mosaic_0001>

<llo_original>
// kernel: dog_forward.1
$region0: #{dog_forward.1}
  #allocation0 [shape = 'u32[]', space=smem, size = 0x4, offset = 0x4, fixed_abs, tag = 'smem constant byte address 0x4 - core index']
  #allocation1 [shape = 'u32[144,128]{1,0:T(1,128)}', space=vmem, size = 0x12000, scoped, tag = 'internal scratch']
  #allocation2 [shape = 'f32[26,16]{1,0:T(8,128)}', space=vmem, size = 0x4000, scoped, tag = 'scratch operand']
  #allocation3 [shape = 'f32[18,18]{1,0:T(8,128)}', space=vmem, size = 0x3000, scoped, tag = 'scratch operand']
  %s0 = inlined_call_operand.vmem [shape: f32[26,26], index: 0, kind: input, shape index: {}]
  %s1 = inlined_call_operand.vmem [shape: s32[4,16,16], index: 1, kind: output, shape index: {0}]
  %s2 = inlined_call_operand.hbm [shape: f32[4,16,16], index: 2, kind: output, shape index: {1}]
  %3 = xla_tuple %s1, %s2
  %s4 = sld [smem:[#allocation0]]
  $region22: #{dog_forward.1} parent=0
    _
  %s6 = ssub.s32 1, %s4
  %s7 = scalar_select 0, %s6, %s4
  $region1: #{dog_forward.1} parent=0
    #allocation4 [shape = 'u8[32768]{0}', space=vmem, size = 0x8000, scoped, tag = 'output window, operand 1, single buffered']
    #allocation5 [shape = 's32[1]{0}', space=sflag, size = 0x4, scoped, tag = 'scoped memory for dog_forward.1']
    %8 = vsyncpa [#allocation5], 0
    // Predicated region
    $region2: #{dog_forward.1} parent=1 // pred_check
      _
    $region3: #{dog_forward.1} parent=1 // pred_check_branch
      %10 = sbr.rel (0) target = $region5
    $region4: #{dog_forward.1} parent=1 // pred_region
      _
    $region5: #{dog_forward.1} parent=1 // pred_fallthru
      _
    %v11 = vld [vmem:[%s0 + $0x3] sm:$0xff]
    %v12 = vld [vmem:[%s0 + $0xb] sm:$0xff]
    %v13 = vld [vmem:[%s0 + $0x13] sm:$0xf]
    %v14 = vmul.f32 %v11, 0.054488685
    %v15 = vmul.f32 %v12, 0.054488685
    %v16 = vmul.f32 %v13, 0.054488685
    %v17 = vmul.f32 %v11, 0.24420135
    %v18 = vmul.f32 %v12, 0.24420135
    %v19 = vmul.f32 %v13, 0.24420135
    %23 = vrot.lane.b32.xlu0 %v17, 127
    %v24 = vpop.permute.xlu0 %23
    %25 = vrot.lane.b32.xlu0 %v18, 127
    %v26 = vpop.permute.xlu0 %25
    %27 = vrot.lane.b32.xlu0 %v19, 127
    %v28 = vpop.permute.xlu0 %27
    %v32 = vadd.f32 %v14, %v24
    %v33 = vadd.f32 %v15, %v26
    %v34 = vadd.f32 %v16, %v28
    %v35 = vmul.f32 %v11, 0.40261996
    %v36 = vmul.f32 %v12, 0.40261996
    %v37 = vmul.f32 %v13, 0.40261996
    %41 = vrot.lane.b32.xlu0 %v35, 126
    %v42 = vpop.permute.xlu0 %41
    %43 = vrot.lane.b32.xlu0 %v36, 126
    %v44 = vpop.permute.xlu0 %43
    %45 = vrot.lane.b32.xlu0 %v37, 126
    %v46 = vpop.permute.xlu0 %45
    %v50 = vadd.f32 %v32, %v42
    %v51 = vadd.f32 %v33, %v44
    %v52 = vadd.f32 %v34, %v46
    %53 = vrot.lane.b32.xlu0 %v17, 125
    %v54 = vpop.permute.xlu0 %53
    %55 = vrot.lane.b32.xlu0 %v18, 125
    %v56 = vpop.permute.xlu0 %55
    %57 = vrot.lane.b32.xlu0 %v19, 125
    %v58 = vpop.permute.xlu0 %57
    %v62 = vadd.f32 %v50, %v54
    %v63 = vadd.f32 %v51, %v56
    %v64 = vadd.f32 %v52, %v58
    %68 = vrot.lane.b32.xlu0 %v14, 124
    %v69 = vpop.permute.xlu0 %68
    %70 = vrot.lane.b32.xlu0 %v15, 124
    %v71 = vpop.permute.xlu0 %70
    %72 = vrot.lane.b32.xlu0 %v16, 124
    %v73 = vpop.permute.xlu0 %72
    %v77 = vadd.f32 %v62, %v69
    %v78 = vadd.f32 %v63, %v71
    %v79 = vadd.f32 %v64, %v73
    %83 = vrot.lane.b32.xlu0 %v77, 125
    %v84 = vpop.permute.xlu0 %83
    %85 = vrot.lane.b32.xlu0 %v78, 125
    %v86 = vpop.permute.xlu0 %85
    %87 = vrot.lane.b32.xlu0 %v79, 125
    %v88 = vpop.permute.xlu0 %87
    %vm92 = vcmask 130048
    %93 = vst.msk [vmem:[#allocation2] sm:$0xff] %vm92, %v84
    %94 = vst.msk [vmem:[#allocation2 + $0x8] sm:$0xff] %vm92, %v86
    %vm95 = vcmask 125952
    %96 = vst.msk [vmem:[#allocation2 + $0x10] sm:$0xf] %vm95, %v88
    %v97 = vld [vmem:[#allocation2] sm:$0xff]
    %v98 = vld [vmem:[#allocation2 + $0x8] sm:$0xff]
    %v99 = vmul.f32 %v97, 0.054488685
    %v100 = vmul.f32 %v98, 0.054488685
    %v101 = vld [vmem:[#allocation2 + $0x1] sm:$0xff]
    %v102 = vld [vmem:[#allocation2 + $0x9] sm:$0xff]
    %v103 = vmul.f32 %v101, 0.24420135
    %v104 = vmul.f32 %v102, 0.24420135
    %v105 = vadd.f32 %v99, %v103
    %v106 = vadd.f32 %v100, %v104
    %v107 = vld [vmem:[#allocation2 + $0x2] sm:$0xff]
    %v108 = vld [vmem:[#allocation2 + $0xa] sm:$0xff]
    %v109 = vmul.f32 %v107, 0.40261996
    %v110 = vmul.f32 %v108, 0.40261996
    %v111 = vadd.f32 %v105, %v109
    %v112 = vadd.f32 %v106, %v110
    %v113 = vld [vmem:[#allocation2 + $0x3] sm:$0xff]
    %v114 = vld [vmem:[#allocation2 + $0xb] sm:$0xff]
    %v115 = vmul.f32 %v113, 0.24420135
    %v116 = vmul.f32 %v114, 0.24420135
    %v117 = vadd.f32 %v111, %v115
    %v118 = vadd.f32 %v112, %v116
    %v119 = vld [vmem:[#allocation2 + $0x4] sm:$0xff]
    %v120 = vld [vmem:[#allocation2 + $0xc] sm:$0xff]
    %v121 = vmul.f32 %v119, 0.054488685
    %v122 = vmul.f32 %v120, 0.054488685
    %v123 = vadd.f32 %v117, %v121
    %v124 = vadd.f32 %v118, %v122
    %v125 = vld [vmem:[%s0 + $0x2] sm:$0xff]
    %v126 = vld [vmem:[%s0 + $0xa] sm:$0xff]
    %v127 = vld [vmem:[%s0 + $0x12] sm:$0x3f]
    %v128 = vmul.f32 %v125, 0.023977406
    %v129 = vmul.f32 %v126, 0.023977406
    %v130 = vmul.f32 %v127, 0.023977406
    %v131 = vmul.f32 %v125, 0.09784279
    %v132 = vmul.f32 %v126, 0.09784279
    %v133 = vmul.f32 %v127, 0.09784279
    %137 = vrot.lane.b32.xlu0 %v131, 127
    %v138 = vpop.permute.xlu0 %137
    %139 = vrot.lane.b32.xlu0 %v132, 127
    %v140 = vpop.permute.xlu0 %139
    %141 = vrot.lane.b32.xlu0 %v133, 127
    %v142 = vpop.permute.xlu0 %141
    %v146 = vadd.f32 %v128, %v138
    %v147 = vadd.f32 %v129, %v140
    %v148 = vadd.f32 %v130, %v142
    %v149 = vmul.f32 %v125, 0.2274913
    %v150 = vmul.f32 %v126, 0.2274913
    %v151 = vmul.f32 %v127, 0.2274913
    %155 = vrot.lane.b32.xlu0 %v149, 126
    %v156 = vpop.permute.xlu0 %155
    %157 = vrot.lane.b32.xlu0 %v150, 126
    %v158 = vpop.permute.xlu0 %157
    %159 = vrot.lane.b32.xlu0 %v151, 126
    %v160 = vpop.permute.xlu0 %159
    %v164 = vadd.f32 %v146, %v156
    %v165 = vadd.f32 %v147, %v158
    %v166 = vadd.f32 %v148, %v160
    %v167 = vmul.f32 %v125, 0.301377
    %v168 = vmul.f32 %v126, 0.301377
    %v169 = vmul.f32 %v127, 0.301377
    %173 = vrot.lane.b32.xlu0 %v167, 125
    %v174 = vpop.permute.xlu0 %173
    %175 = vrot.lane.b32.xlu0 %v168, 125
    %v176 = vpop.permute.xlu0 %175
    %177 = vrot.lane.b32.xlu0 %v169, 125
    %v178 = vpop.permute.xlu0 %177
    %v182 = vadd.f32 %v164, %v174
    %v183 = vadd.f32 %v165, %v176
    %v184 = vadd.f32 %v166, %v178
    %185 = vrot.lane.b32.xlu0 %v149, 124
    %v186 = vpop.permute.xlu0 %185
    %187 = vrot.lane.b32.xlu0 %v150, 124
    %v188 = vpop.permute.xlu0 %187
    %189 = vrot.lane.b32.xlu0 %v151, 124
    %v190 = vpop.permute.xlu0 %189
    %v194 = vadd.f32 %v182, %v186
    %v195 = vadd.f32 %v183, %v188
    %v196 = vadd.f32 %v184, %v190
    %197 = vrot.lane.b32.xlu0 %v131, 123
    %v198 = vpop.permute.xlu0 %197
    %199 = vrot.lane.b32.xlu0 %v132, 123
    %v200 = vpop.permute.xlu0 %199
    %201 = vrot.lane.b32.xlu0 %v133, 123
    %v202 = vpop.permute.xlu0 %201
    %v206 = vadd.f32 %v194, %v198
    %v207 = vadd.f32 %v195, %v200
    %v208 = vadd.f32 %v196, %v202
    %212 = vrot.lane.b32.xlu0 %v128, 122
    %v213 = vpop.permute.xlu0 %212
    %214 = vrot.lane.b32.xlu0 %v129, 122
    %v215 = vpop.permute.xlu0 %214
    %216 = vrot.lane.b32.xlu0 %v130, 122
    %v217 = vpop.permute.xlu0 %216
    %v221 = vadd.f32 %v206, %v213
    %v222 = vadd.f32 %v207, %v215
    %v223 = vadd.f32 %v208, %v217
    %227 = vrot.lane.b32.xlu0 %v221, 126
    %v228 = vpop.permute.xlu0 %227
    %229 = vrot.lane.b32.xlu0 %v222, 126
    %v230 = vpop.permute.xlu0 %229
    %231 = vrot.lane.b32.xlu0 %v223, 126
    %v232 = vpop.permute.xlu0 %231
    %236 = vst.msk [vmem:[#allocation2] sm:$0xff] %vm92, %v228
    %237 = vst.msk [vmem:[#allocation2 + $0x8] sm:$0xff] %vm92, %v230
    %vm238 = vcmask 128000
    %239 = vst.msk [vmem:[#allocation2 + $0x10] sm:$0x3f] %vm238, %v232
    %v240 = vld [vmem:[#allocation2] sm:$0xff]
    %v241 = vld [vmem:[#allocation2 + $0x8] sm:$0xff]
    %v242 = vmul.f32 %v240, 0.023977406
    %v243 = vmul.f32 %v241, 0.023977406
    %v244 = vld [vmem:[#allocation2 + $0x1] sm:$0xff]
    %v245 = vld [vmem:[#allocation2 + $0x9] sm:$0xff]
    %v246 = vmul.f32 %v244, 0.09784279
    %v247 = vmul.f32 %v245, 0.09784279
    %v248 = vadd.f32 %v242, %v246
    %v249 = vadd.f32 %v243, %v247
    %v250 = vld [vmem:[#allocation2 + $0x2] sm:$0xff]
    %v251 = vld [vmem:[#allocation2 + $0xa] sm:$0xff]
    %v252 = vmul.f32 %v250, 0.2274913
    %v253 = vmul.f32 %v251, 0.2274913
    %v254 = vadd.f32 %v248, %v252
    %v255 = vadd.f32 %v249, %v253
    %v256 = vld [vmem:[#allocation2 + $0x3] sm:$0xff]
    %v257 = vld [vmem:[#allocation2 + $0xb] sm:$0xff]
    %v258 = vmul.f32 %v256, 0.301377
    %v259 = vmul.f32 %v257, 0.301377
    %v260 = vadd.f32 %v254, %v258
    %v261 = vadd.f32 %v255, %v259
    %v262 = vld [vmem:[#allocation2 + $0x4] sm:$0xff]
    %v263 = vld [vmem:[#allocation2 + $0xc] sm:$0xff]
    %v264 = vmul.f32 %v262, 0.2274913
    %v265 = vmul.f32 %v263, 0.2274913
    %v266 = vadd.f32 %v260, %v264
    %v267 = vadd.f32 %v261, %v265
    %v268 = vld [vmem:[#allocation2 + $0x5] sm:$0xff]
    %v269 = vld [vmem:[#allocation2 + $0xd] sm:$0xff]
    %v270 = vmul.f32 %v268, 0.09784279
    %v271 = vmul.f32 %v269, 0.09784279
    %v272 = vadd.f32 %v266, %v270
    %v273 = vadd.f32 %v267, %v271
    %v274 = vld [vmem:[#allocation2 + $0x6] sm:$0xff]
    %v275 = vld [vmem:[#allocation2 + $0xe] sm:$0xff]
    %v276 = vmul.f32 %v274, 0.023977406
    %v277 = vmul.f32 %v275, 0.023977406
    %v278 = vadd.f32 %v272, %v276
    %v279 = vadd.f32 %v273, %v277
    %v280 = vld [vmem:[%s0 + $0x2] sm:$0xff]
    %v281 = vld [vmem:[%s0 + $0xa] sm:$0xff]
    %v282 = vld [vmem:[%s0 + $0x12] sm:$0x3f]
    %v283 = vmul.f32 %v280, 0.048986737
    %v284 = vmul.f32 %v281, 0.048986737
    %v285 = vmul.f32 %v282, 0.048986737
    %v286 = vmul.f32 %v280, 0.120487936
    %v287 = vmul.f32 %v281, 0.120487936
    %v288 = vmul.f32 %v282, 0.120487936
    %292 = vrot.lane.b32.xlu0 %v286, 127
    %v293 = vpop.permute.xlu0 %292
    %294 = vrot.lane.b32.xlu0 %v287, 127
    %v295 = vpop.permute.xlu0 %294
    %296 = vrot.lane.b32.xlu0 %v288, 127
    %v297 = vpop.permute.xlu0 %296
    %v301 = vadd.f32 %v283, %v293
    %v302 = vadd.f32 %v284, %v295
    %v303 = vadd.f32 %v285, %v297
    %v304 = vmul.f32 %v280, 0.20675813
    %v305 = vmul.f32 %v281, 0.20675813
    %v306 = vmul.f32 %v282, 0.20675813
    %310 = vrot.lane.b32.xlu0 %v304, 126
    %v311 = vpop.permute.xlu0 %310
    %312 = vrot.lane.b32.xlu0 %v305, 126
    %v313 = vpop.permute.xlu0 %312
    %314 = vrot.lane.b32.xlu0 %v306, 126
    %v315 = vpop.permute.xlu0 %314
    %v319 = vadd.f32 %v301, %v311
    %v320 = vadd.f32 %v302, %v313
    %v321 = vadd.f32 %v303, %v315
    %v322 = vmul.f32 %v280, 0.24753441
    %v323 = vmul.f32 %v281, 0.24753441
    %v324 = vmul.f32 %v282, 0.24753441
    %328 = vrot.lane.b32.xlu0 %v322, 125
    %v329 = vpop.permute.xlu0 %328
    %330 = vrot.lane.b32.xlu0 %v323, 125
    %v331 = vpop.permute.xlu0 %330
    %332 = vrot.lane.b32.xlu0 %v324, 125
    %v333 = vpop.permute.xlu0 %332
    %v337 = vadd.f32 %v319, %v329
    %v338 = vadd.f32 %v320, %v331
    %v339 = vadd.f32 %v321, %v333
    %340 = vrot.lane.b32.xlu0 %v304, 124
    %v341 = vpop.permute.xlu0 %340
    %342 = vrot.lane.b32.xlu0 %v305, 124
    %v343 = vpop.permute.xlu0 %342
    %344 = vrot.lane.b32.xlu0 %v306, 124
    %v345 = vpop.permute.xlu0 %344
    %v349 = vadd.f32 %v337, %v341
    %v350 = vadd.f32 %v338, %v343
    %v351 = vadd.f32 %v339, %v345
    %352 = vrot.lane.b32.xlu0 %v286, 123
    %v353 = vpop.permute.xlu0 %352
    %354 = vrot.lane.b32.xlu0 %v287, 123
    %v355 = vpop.permute.xlu0 %354
    %356 = vrot.lane.b32.xlu0 %v288, 123
    %v357 = vpop.permute.xlu0 %356
    %v361 = vadd.f32 %v349, %v353
    %v362 = vadd.f32 %v350, %v355
    %v363 = vadd.f32 %v351, %v357
    %367 = vrot.lane.b32.xlu0 %v283, 122
    %v368 = vpop.permute.xlu0 %367
    %369 = vrot.lane.b32.xlu0 %v284, 122
    %v370 = vpop.permute.xlu0 %369
    %371 = vrot.lane.b32.xlu0 %v285, 122
    %v372 = vpop.permute.xlu0 %371
    %v376 = vadd.f32 %v361, %v368
    %v377 = vadd.f32 %v362, %v370
    %v378 = vadd.f32 %v363, %v372
    %382 = vrot.lane.b32.xlu0 %v376, 126
    %v383 = vpop.permute.xlu0 %382
    %384 = vrot.lane.b32.xlu0 %v377, 126
    %v385 = vpop.permute.xlu0 %384
    %386 = vrot.lane.b32.xlu0 %v378, 126
    %v387 = vpop.permute.xlu0 %386
    %391 = vst.msk [vmem:[#allocation2] sm:$0xff] %vm92, %v383
    %392 = vst.msk [vmem:[#allocation2 + $0x8] sm:$0xff] %vm92, %v385
    %393 = vst.msk [vmem:[#allocation2 + $0x10] sm:$0x3f] %vm238, %v387
    %v394 = vld [vmem:[#allocation2] sm:$0xff]
    %v395 = vld [vmem:[#allocation2 + $0x8] sm:$0xff]
    %v396 = vmul.f32 %v394, 0.048986737
    %v397 = vmul.f32 %v395, 0.048986737
    %v398 = vld [vmem:[#allocation2 + $0x1] sm:$0xff]
    %v399 = vld [vmem:[#allocation2 + $0x9] sm:$0xff]
    %v400 = vmul.f32 %v398, 0.120487936
    %v401 = vmul.f32 %v399, 0.120487936
    %v402 = vadd.f32 %v396, %v400
    %v403 = vadd.f32 %v397, %v401
    %v404 = vld [vmem:[#allocation2 + $0x2] sm:$0xff]
    %v405 = vld [vmem:[#allocation2 + $0xa] sm:$0xff]
    %v406 = vmul.f32 %v404, 0.20675813
    %v407 = vmul.f32 %v405, 0.20675813
    %v408 = vadd.f32 %v402, %v406
    %v409 = vadd.f32 %v403, %v407
    %v410 = vld [vmem:[#allocation2 + $0x3] sm:$0xff]
    %v411 = vld [vmem:[#allocation2 + $0xb] sm:$0xff]
    %v412 = vmul.f32 %v410, 0.24753441
    %v413 = vmul.f32 %v411, 0.24753441
    %v414 = vadd.f32 %v408, %v412
    %v415 = vadd.f32 %v409, %v413
    %v416 = vld [vmem:[#allocation2 + $0x4] sm:$0xff]
    %v417 = vld [vmem:[#allocation2 + $0xc] sm:$0xff]
    %v418 = vmul.f32 %v416, 0.20675813
    %v419 = vmul.f32 %v417, 0.20675813
    %v420 = vadd.f32 %v414, %v418
    %v421 = vadd.f32 %v415, %v419
    %v422 = vld [vmem:[#allocation2 + $0x5] sm:$0xff]
    %v423 = vld [vmem:[#allocation2 + $0xd] sm:$0xff]
    %v424 = vmul.f32 %v422, 0.120487936
    %v425 = vmul.f32 %v423, 0.120487936
    %v426 = vadd.f32 %v420, %v424
    %v427 = vadd.f32 %v421, %v425
    %v428 = vld [vmem:[#allocation2 + $0x6] sm:$0xff]
    %v429 = vld [vmem:[#allocation2 + $0xe] sm:$0xff]
    %v430 = vmul.f32 %v428, 0.048986737
    %v431 = vmul.f32 %v429, 0.048986737
    %v432 = vadd.f32 %v426, %v430
    %v433 = vadd.f32 %v427, %v431
    %v434 = vld [vmem:[%s0 + $0x1] sm:$0xff]
    %v435 = vld [vmem:[%s0 + $0x9] sm:$0xff]
    %v436 = vld [vmem:[%s0 + $0x11] sm:$0xff]
    %v437 = vmul.f32 %v434, 0.02763055
    %v438 = vmul.f32 %v435, 0.02763055
    %v439 = vmul.f32 %v436, 0.02763055
    %v440 = vmul.f32 %v434, 0.06628224
    %v441 = vmul.f32 %v435, 0.06628224
    %v442 = vmul.f32 %v436, 0.06628224
    %446 = vrot.lane.b32.xlu0 %v440, 127
    %v447 = vpop.permute.xlu0 %446
    %448 = vrot.lane.b32.xlu0 %v441, 127
    %v449 = vpop.permute.xlu0 %448
    %450 = vrot.lane.b32.xlu0 %v442, 127
    %v451 = vpop.permute.xlu0 %450
    %v455 = vadd.f32 %v437, %v447
    %v456 = vadd.f32 %v438, %v449
    %v457 = vadd.f32 %v439, %v451
    %v458 = vmul.f32 %v434, 0.12383154
    %v459 = vmul.f32 %v435, 0.12383154
    %v460 = vmul.f32 %v436, 0.12383154
    %464 = vrot.lane.b32.xlu0 %v458, 126
    %v465 = vpop.permute.xlu0 %464
    %466 = vrot.lane.b32.xlu0 %v459, 126
    %v467 = vpop.permute.xlu0 %466
    %468 = vrot.lane.b32.xlu0 %v460, 126
    %v469 = vpop.permute.xlu0 %468
    %v473 = vadd.f32 %v455, %v465
    %v474 = vadd.f32 %v456, %v467
    %v475 = vadd.f32 %v457, %v469
    %v476 = vmul.f32 %v434, 0.18017383
    %v477 = vmul.f32 %v435, 0.18017383
    %v478 = vmul.f32 %v436, 0.18017383
    %482 = vrot.lane.b32.xlu0 %v476, 125
    %v483 = vpop.permute.xlu0 %482
    %484 = vrot.lane.b32.xlu0 %v477, 125
    %v485 = vpop.permute.xlu0 %484
    %486 = vrot.lane.b32.xlu0 %v478, 125
    %v487 = vpop.permute.xlu0 %486
    %v491 = vadd.f32 %v473, %v483
    %v492 = vadd.f32 %v474, %v485
    %v493 = vadd.f32 %v475, %v487
    %v494 = vmul.f32 %v434, 0.20416369
    %v495 = vmul.f32 %v435, 0.20416369
    %v496 = vmul.f32 %v436, 0.20416369
    %500 = vrot.lane.b32.xlu0 %v494, 124
    %v501 = vpop.permute.xlu0 %500
    %502 = vrot.lane.b32.xlu0 %v495, 124
    %v503 = vpop.permute.xlu0 %502
    %504 = vrot.lane.b32.xlu0 %v496, 124
    %v505 = vpop.permute.xlu0 %504
    %v509 = vadd.f32 %v491, %v501
    %v510 = vadd.f32 %v492, %v503
    %v511 = vadd.f32 %v493, %v505
    %512 = vrot.lane.b32.xlu0 %v476, 123
    %v513 = vpop.permute.xlu0 %512
    %514 = vrot.lane.b32.xlu0 %v477, 123
    %v515 = vpop.permute.xlu0 %514
    %516 = vrot.lane.b32.xlu0 %v478, 123
    %v517 = vpop.permute.xlu0 %516
    %v521 = vadd.f32 %v509, %v513
    %v522 = vadd.f32 %v510, %v515
    %v523 = vadd.f32 %v511, %v517
    %524 = vrot.lane.b32.xlu0 %v458, 122
    %v525 = vpop.permute.xlu0 %524
    %526 = vrot.lane.b32.xlu0 %v459, 122
    %v527 = vpop.permute.xlu0 %526
    %528 = vrot.lane.b32.xlu0 %v460, 122
    %v529 = vpop.permute.xlu0 %528
    %v533 = vadd.f32 %v521, %v525
    %v534 = vadd.f32 %v522, %v527
    %v535 = vadd.f32 %v523, %v529
    %536 = vrot.lane.b32.xlu0 %v440, 121
    %v537 = vpop.permute.xlu0 %536
    %538 = vrot.lane.b32.xlu0 %v441, 121
    %v539 = vpop.permute.xlu0 %538
    %540 = vrot.lane.b32.xlu0 %v442, 121
    %v541 = vpop.permute.xlu0 %540
    %v545 = vadd.f32 %v533, %v537
    %v546 = vadd.f32 %v534, %v539
    %v547 = vadd.f32 %v535, %v541
    %551 = vrot.lane.b32.xlu0 %v437, 120
    %v552 = vpop.permute.xlu0 %551
    %553 = vrot.lane.b32.xlu0 %v438, 120
    %v554 = vpop.permute.xlu0 %553
    %555 = vrot.lane.b32.xlu0 %v439, 120
    %v556 = vpop.permute.xlu0 %555
    %v560 = vadd.f32 %v545, %v552
    %v561 = vadd.f32 %v546, %v554
    %v562 = vadd.f32 %v547, %v556
    %566 = vrot.lane.b32.xlu0 %v560, 127
    %v567 = vpop.permute.xlu0 %566
    %568 = vrot.lane.b32.xlu0 %v561, 127
    %v569 = vpop.permute.xlu0 %568
    %570 = vrot.lane.b32.xlu0 %v562, 127
    %v571 = vpop.permute.xlu0 %570
    %575 = vst.msk [vmem:[#allocation2] sm:$0xff] %vm92, %v567
    %576 = vst.msk [vmem:[#allocation2 + $0x8] sm:$0xff] %vm92, %v569
    %577 = vst.msk [vmem:[#allocation2 + $0x10] sm:$0xff] %vm92, %v571
    %v578 = vld [vmem:[#allocation2] sm:$0xff]
    %v579 = vld [vmem:[#allocation2 + $0x8] sm:$0xff]
    %v580 = vmul.f32 %v578, 0.02763055
    %v581 = vmul.f32 %v579, 0.02763055
    %v582 = vld [vmem:[#allocation2 + $0x1] sm:$0xff]
    %v583 = vld [vmem:[#allocation2 + $0x9] sm:$0xff]
    %v584 = vmul.f32 %v582, 0.06628224
    %v585 = vmul.f32 %v583, 0.06628224
    %v586 = vadd.f32 %v580, %v584
    %v587 = vadd.f32 %v581, %v585
    %v588 = vld [vmem:[#allocation2 + $0x2] sm:$0xff]
    %v589 = vld [vmem:[#allocation2 + $0xa] sm:$0xff]
    %v590 = vmul.f32 %v588, 0.12383154
    %v591 = vmul.f32 %v589, 0.12383154
    %v592 = vadd.f32 %v586, %v590
    %v593 = vadd.f32 %v587, %v591
    %v594 = vld [vmem:[#allocation2 + $0x3] sm:$0xff]
    %v595 = vld [vmem:[#allocation2 + $0xb] sm:$0xff]
    %v596 = vmul.f32 %v594, 0.18017383
    %v597 = vmul.f32 %v595, 0.18017383
    %v598 = vadd.f32 %v592, %v596
    %v599 = vadd.f32 %v593, %v597
    %v600 = vld [vmem:[#allocation2 + $0x4] sm:$0xff]
    %v601 = vld [vmem:[#allocation2 + $0xc] sm:$0xff]
    %v602 = vmul.f32 %v600, 0.20416369
    %v603 = vmul.f32 %v601, 0.20416369
    %v604 = vadd.f32 %v598, %v602
    %v605 = vadd.f32 %v599, %v603
    %v606 = vld [vmem:[#allocation2 + $0x5] sm:$0xff]
    %v607 = vld [vmem:[#allocation2 + $0xd] sm:$0xff]
    %v608 = vmul.f32 %v606, 0.18017383
    %v609 = vmul.f32 %v607, 0.18017383
    %v610 = vadd.f32 %v604, %v608
    %v611 = vadd.f32 %v605, %v609
    %v612 = vld [vmem:[#allocation2 + $0x6] sm:$0xff]
    %v613 = vld [vmem:[#allocation2 + $0xe] sm:$0xff]
    %v614 = vmul.f32 %v612, 0.12383154
    %v615 = vmul.f32 %v613, 0.12383154
    %v616 = vadd.f32 %v610, %v614
    %v617 = vadd.f32 %v611, %v615
    %v618 = vld [vmem:[#allocation2 + $0x7] sm:$0xff]
    %v619 = vld [vmem:[#allocation2 + $0xf] sm:$0xff]
    %v620 = vmul.f32 %v618, 0.06628224
    %v621 = vmul.f32 %v619, 0.06628224
    %v622 = vadd.f32 %v616, %v620
    %v623 = vadd.f32 %v617, %v621
    %v624 = vld [vmem:[#allocation2 + $0x10] sm:$0xff]
    %v625 = vmul.f32 %v624, 0.02763055
    %v626 = vadd.f32 %v622, %v581
    %v627 = vadd.f32 %v623, %v625
    %v628 = vld [vmem:[%s0] sm:$0xff]
    %v629 = vld [vmem:[%s0 + $0x8] sm:$0xff]
    %v630 = vld [vmem:[%s0 + $0x10] sm:$0xff]
    %v631 = vld [vmem:[%s0 + $0x18] sm:$0x3]
    %v632 = vmul.f32 %v628, 0.01751907
    %v633 = vmul.f32 %v629, 0.01751907
    %v634 = vmul.f32 %v630, 0.01751907
    %v635 = vmul.f32 %v631, 0.01751907
    %v636 = vmul.f32 %v628, 0.040037666
    %v637 = vmul.f32 %v629, 0.040037666
    %v638 = vmul.f32 %v630, 0.040037666
    %v639 = vmul.f32 %v631, 0.040037666
    %644 = vrot.lane.b32.xlu0 %v636, 127
    %v645 = vpop.permute.xlu0 %644
    %646 = vrot.lane.b32.xlu0 %v637, 127
    %v647 = vpop.permute.xlu0 %646
    %648 = vrot.lane.b32.xlu0 %v638, 127
    %v649 = vpop.permute.xlu0 %648
    %650 = vrot.lane.b32.xlu0 %v639, 127
    %v651 = vpop.permute.xlu0 %650
    %v656 = vadd.f32 %v632, %v645
    %v657 = vadd.f32 %v633, %v647
    %v658 = vadd.f32 %v634, %v649
    %v659 = vadd.f32 %v635, %v651
    %v660 = vmul.f32 %v628, 0.07614792
    %v661 = vmul.f32 %v629, 0.07614792
    %v662 = vmul.f32 %v630, 0.07614792
    %v663 = vmul.f32 %v631, 0.07614792
    %668 = vrot.lane.b32.xlu0 %v660, 126
    %v669 = vpop.permute.xlu0 %668
    %670 = vrot.lane.b32.xlu0 %v661, 126
    %v671 = vpop.permute.xlu0 %670
    %672 = vrot.lane.b32.xlu0 %v662, 126
    %v673 = vpop.permute.xlu0 %672
    %674 = vrot.lane.b32.xlu0 %v663, 126
    %v675 = vpop.permute.xlu0 %674
    %v680 = vadd.f32 %v656, %v669
    %v681 = vadd.f32 %v657, %v671
    %v682 = vadd.f32 %v658, %v673
    %v683 = vadd.f32 %v659, %v675
    %v684 = vmul.f32 %v628, 0.12052551
    %v685 = vmul.f32 %v629, 0.12052551
    %v686 = vmul.f32 %v630, 0.12052551
    %v687 = vmul.f32 %v631, 0.12052551
    %692 = vrot.lane.b32.xlu0 %v684, 125
    %v693 = vpop.permute.xlu0 %692
    %694 = vrot.lane.b32.xlu0 %v685, 125
    %v695 = vpop.permute.xlu0 %694
    %696 = vrot.lane.b32.xlu0 %v686, 125
    %v697 = vpop.permute.xlu0 %696
    %698 = vrot.lane.b32.xlu0 %v687, 125
    %v699 = vpop.permute.xlu0 %698
    %v704 = vadd.f32 %v680, %v693
    %v705 = vadd.f32 %v681, %v695
    %v706 = vadd.f32 %v682, %v697
    %v707 = vadd.f32 %v683, %v699
    %v708 = vmul.f32 %v628, 0.15875651
    %v709 = vmul.f32 %v629, 0.15875651
    %v710 = vmul.f32 %v630, 0.15875651
    %v711 = vmul.f32 %v631, 0.15875651
    %716 = vrot.lane.b32.xlu0 %v708, 124
    %v717 = vpop.permute.xlu0 %716
    %718 = vrot.lane.b32.xlu0 %v709, 124
    %v719 = vpop.permute.xlu0 %718
    %720 = vrot.lane.b32.xlu0 %v710, 124
    %v721 = vpop.permute.xlu0 %720
    %722 = vrot.lane.b32.xlu0 %v711, 124
    %v723 = vpop.permute.xlu0 %722
    %v728 = vadd.f32 %v704, %v717
    %v729 = vadd.f32 %v705, %v719
    %v730 = vadd.f32 %v706, %v721
    %v731 = vadd.f32 %v707, %v723
    %v732 = vmul.f32 %v628, 0.17402664
    %v733 = vmul.f32 %v629, 0.17402664
    %v734 = vmul.f32 %v630, 0.17402664
    %v735 = vmul.f32 %v631, 0.17402664
    %740 = vrot.lane.b32.xlu0 %v732, 123
    %v741 = vpop.permute.xlu0 %740
    %742 = vrot.lane.b32.xlu0 %v733, 123
    %v743 = vpop.permute.xlu0 %742
    %744 = vrot.lane.b32.xlu0 %v734, 123
    %v745 = vpop.permute.xlu0 %744
    %746 = vrot.lane.b32.xlu0 %v735, 123
    %v747 = vpop.permute.xlu0 %746
    %v752 = vadd.f32 %v728, %v741
    %v753 = vadd.f32 %v729, %v743
    %v754 = vadd.f32 %v730, %v745
    %v755 = vadd.f32 %v731, %v747
    %756 = vrot.lane.b32.xlu0 %v708, 122
    %v757 = vpop.permute.xlu0 %756
    %758 = vrot.lane.b32.xlu0 %v709, 122
    %v759 = vpop.permute.xlu0 %758
    %760 = vrot.lane.b32.xlu0 %v710, 122
    %v761 = vpop.permute.xlu0 %760
    %762 = vrot.lane.b32.xlu0 %v711, 122
    %v763 = vpop.permute.xlu0 %762
    %v768 = vadd.f32 %v752, %v757
    %v769 = vadd.f32 %v753, %v759
    %v770 = vadd.f32 %v754, %v761
    %v771 = vadd.f32 %v755, %v763
    %772 = vrot.lane.b32.xlu0 %v684, 121
    %v773 = vpop.permute.xlu0 %772
    %774 = vrot.lane.b32.xlu0 %v685, 121
    %v775 = vpop.permute.xlu0 %774
    %776 = vrot.lane.b32.xlu0 %v686, 121
    %v777 = vpop.permute.xlu0 %776
    %778 = vrot.lane.b32.xlu0 %v687, 121
    %v779 = vpop.permute.xlu0 %778
    %v784 = vadd.f32 %v768, %v773
    %v785 = vadd.f32 %v769, %v775
    %v786 = vadd.f32 %v770, %v777
    %v787 = vadd.f32 %v771, %v779
    %788 = vrot.lane.b32.xlu0 %v660, 120
    %v789 = vpop.permute.xlu0 %788
    %790 = vrot.lane.b32.xlu0 %v661, 120
    %v791 = vpop.permute.xlu0 %790
    %792 = vrot.lane.b32.xlu0 %v662, 120
    %v793 = vpop.permute.xlu0 %792
    %794 = vrot.lane.b32.xlu0 %v663, 120
    %v795 = vpop.permute.xlu0 %794
    %v800 = vadd.f32 %v784, %v789
    %v801 = vadd.f32 %v785, %v791
    %v802 = vadd.f32 %v786, %v793
    %v803 = vadd.f32 %v787, %v795
    %804 = vrot.lane.b32.xlu0 %v636, 119
    %v805 = vpop.permute.xlu0 %804
    %806 = vrot.lane.b32.xlu0 %v637, 119
    %v807 = vpop.permute.xlu0 %806
    %808 = vrot.lane.b32.xlu0 %v638, 119
    %v809 = vpop.permute.xlu0 %808
    %810 = vrot.lane.b32.xlu0 %v639, 119
    %v811 = vpop.permute.xlu0 %810
    %v816 = vadd.f32 %v800, %v805
    %v817 = vadd.f32 %v801, %v807
    %v818 = vadd.f32 %v802, %v809
    %v819 = vadd.f32 %v803, %v811
    %824 = vrot.lane.b32.xlu0 %v632, 118
    %v825 = vpop.permute.xlu0 %824
    %826 = vrot.lane.b32.xlu0 %v633, 118
    %v827 = vpop.permute.xlu0 %826
    %828 = vrot.lane.b32.xlu0 %v634, 118
    %v829 = vpop.permute.xlu0 %828
    %830 = vrot.lane.b32.xlu0 %v635, 118
    %v831 = vpop.permute.xlu0 %830
    %v836 = vadd.f32 %v816, %v825
    %v837 = vadd.f32 %v817, %v827
    %v838 = vadd.f32 %v818, %v829
    %v839 = vadd.f32 %v819, %v831
    %840 = vst.msk [vmem:[#allocation2] sm:$0xff] %vm92, %v836
    %841 = vst.msk [vmem:[#allocation2 + $0x8] sm:$0xff] %vm92, %v837
    %842 = vst.msk [vmem:[#allocation2 + $0x10] sm:$0xff] %vm92, %v838
    %vm843 = vcmask 123904
    %844 = vst.msk [vmem:[#allocation2 + $0x18] sm:$0x3] %vm843, %v839
    %v845 = vld [vmem:[#allocation2] sm:$0xff]
    %v846 = vld [vmem:[#allocation2 + $0x8] sm:$0xff]
    %v847 = vmul.f32 %v845, 0.01751907
    %v848 = vmul.f32 %v846, 0.01751907
    %v849 = vld [vmem:[#allocation2 + $0x1] sm:$0xff]
    %v850 = vld [vmem:[#allocation2 + $0x9] sm:$0xff]
    %v851 = vmul.f32 %v849, 0.040037666
    %v852 = vmul.f32 %v850, 0.040037666
    %v853 = vadd.f32 %v847, %v851
    %v854 = vadd.f32 %v848, %v852
    %v855 = vld [vmem:[#allocation2 + $0x2] sm:$0xff]
    %v856 = vld [vmem:[#allocation2 + $0xa] sm:$0xff]
    %v857 = vmul.f32 %v855, 0.07614792
    %v858 = vmul.f32 %v856, 0.07614792
    %v859 = vadd.f32 %v853, %v857
    %v860 = vadd.f32 %v854, %v858
    %v861 = vld [vmem:[#allocation2 + $0x3] sm:$0xff]
    %v862 = vld [vmem:[#allocation2 + $0xb] sm:$0xff]
    %v863 = vmul.f32 %v861, 0.12052551
    %v864 = vmul.f32 %v862, 0.12052551
    %v865 = vadd.f32 %v859, %v863
    %v866 = vadd.f32 %v860, %v864
    %v867 = vld [vmem:[#allocation2 + $0x4] sm:$0xff]
    %v868 = vld [vmem:[#allocation2 + $0xc] sm:$0xff]
    %v869 = vmul.f32 %v867, 0.15875651
    %v870 = vmul.f32 %v868, 0.15875651
    %v871 = vadd.f32 %v865, %v869
    %v872 = vadd.f32 %v866, %v870
    %v873 = vld [vmem:[#allocation2 + $0x5] sm:$0xff]
    %v874 = vld [vmem:[#allocation2 + $0xd] sm:$0xff]
    %v875 = vmul.f32 %v873, 0.17402664
    %v876 = vmul.f32 %v874, 0.17402664
    %v877 = vadd.f32 %v871, %v875
    %v878 = vadd.f32 %v872, %v876
    %v879 = vld [vmem:[#allocation2 + $0x6] sm:$0xff]
    %v880 = vld [vmem:[#allocation2 + $0xe] sm:$0xff]
    %v881 = vmul.f32 %v879, 0.15875651
    %v882 = vmul.f32 %v880, 0.15875651
    %v883 = vadd.f32 %v877, %v881
    %v884 = vadd.f32 %v878, %v882
    %v885 = vld [vmem:[#allocation2 + $0x7] sm:$0xff]
    %v886 = vld [vmem:[#allocation2 + $0xf] sm:$0xff]
    %v887 = vmul.f32 %v885, 0.12052551
    %v888 = vmul.f32 %v886, 0.12052551
    %v889 = vadd.f32 %v883, %v887
    %v890 = vadd.f32 %v884, %v888
    %v891 = vld [vmem:[#allocation2 + $0x10] sm:$0xff]
    %v892 = vmul.f32 %v846, 0.07614792
    %v893 = vmul.f32 %v891, 0.07614792
    %v894 = vadd.f32 %v889, %v892
    %v895 = vadd.f32 %v890, %v893
    %v896 = vld [vmem:[#allocation2 + $0x11] sm:$0xff]
    %v897 = vmul.f32 %v896, 0.040037666
    %v898 = vadd.f32 %v894, %v852
    %v899 = vadd.f32 %v895, %v897
    %v900 = vld [vmem:[#allocation2 + $0x12] sm:$0xff]
    %v901 = vmul.f32 %v856, 0.01751907
    %v902 = vmul.f32 %v900, 0.01751907
    %v903 = vadd.f32 %v898, %v901
    %v904 = vadd.f32 %v899, %v902
    %v905 = vsub.f32 %v123, %v278
    %v906 = vsub.f32 %v124, %v279
    %v907 = vsub.f32 %v278, %v432
    %v908 = vsub.f32 %v279, %v433
    %v909 = vmul.f32 %v907, 1.3333334
    %v910 = vmul.f32 %v908, 1.3333334
    %v911 = vsub.f32 %v432, %v626
    %v912 = vsub.f32 %v433, %v627
    %v913 = vmul.f32 %v911, 1.6666666
    %v914 = vmul.f32 %v912, 1.6666666
    %v915 = vsub.f32 %v626, %v903
    %v916 = vsub.f32 %v627, %v904
    %v917 = vmul.f32 %v915, 2.0
    %v918 = vmul.f32 %v916, 2.0
    %vm919 = vcmask 146432
    %920 = vst.msk [vmem:[#allocation3] sm:$0xff] %vm919, -inf
    %921 = vst.msk [vmem:[#allocation3 + $0x8] sm:$0xff] %vm919, -inf
    %vm922 = vcmask 140288
    %923 = vst.msk [vmem:[#allocation3 + $0x10] sm:$0x3] %vm922, -inf
    %926 = vrot.lane.b32.xlu0 %v905, 1
    %v927 = vpop.permute.xlu0 %926
    %928 = vrot.lane.b32.xlu0 %v906, 1
    %v929 = vpop.permute.xlu0 %928
    %vm932 = vcmask 138248
    %933 = vst.msk [vmem:[#allocation3 + $0x1] sm:$0xff] %vm932, %v927
    %934 = vst.msk [vmem:[#allocation3 + $0x9] sm:$0xff] %vm932, %v929
    %v935 = vld [vmem:[#allocation3 + $0x1] sm:$0xff]
    %v936 = vld [vmem:[#allocation3 + $0x9] sm:$0xff]
    %v937 = vmax.f32 %v935, %v905
    %v938 = vmax.f32 %v936, %v906
    %941 = vrot.lane.b32.xlu0 %v935, 126
    %v942 = vpop.permute.xlu0 %941
    %943 = vrot.lane.b32.xlu0 %v936, 126
    %v944 = vpop.permute.xlu0 %943
    %v947 = vmax.f32 %v937, %v942
    %v948 = vmax.f32 %v938, %v944
    %951 = vrot.lane.b32.xlu0 %v947, 1
    %v952 = vpop.permute.xlu0 %951
    %953 = vrot.lane.b32.xlu0 %v948, 1
    %v954 = vpop.permute.xlu0 %953
    %957 = vst.msk [vmem:[#allocation3 + $0x1] sm:$0xff] %vm932, %v952
    %958 = vst.msk [vmem:[#allocation3 + $0x9] sm:$0xff] %vm932, %v954
    %v959 = vld [vmem:[#allocation3] sm:$0xff]
    %v960 = vld [vmem:[#allocation3 + $0x8] sm:$0xff]
    %v961 = vmax.f32 %v959, %v952
    %v962 = vmax.f32 %v960, %v954
    %v963 = vld [vmem:[#allocation3 + $0x2] sm:$0xff]
    %v964 = vld [vmem:[#allocation3 + $0xa] sm:$0xff]
    %v965 = vmax.f32 %v961, %v963
    %v966 = vmax.f32 %v962, %v964
    %969 = vrot.lane.b32.xlu0 %v909, 1
    %v970 = vpop.permute.xlu0 %969
    %971 = vrot.lane.b32.xlu0 %v910, 1
    %v972 = vpop.permute.xlu0 %971
    %975 = vst.msk [vmem:[#allocation3 + $0x1] sm:$0xff] %vm932, %v970
    %976 = vst.msk [vmem:[#allocation3 + $0x9] sm:$0xff] %vm932, %v972
    %v977 = vld [vmem:[#allocation3 + $0x1] sm:$0xff]
    %v978 = vld [vmem:[#allocation3 + $0x9] sm:$0xff]
    %v979 = vmax.f32 %v977, %v909
    %v980 = vmax.f32 %v978, %v910
    %983 = vrot.lane.b32.xlu0 %v977, 126
    %v984 = vpop.permute.xlu0 %983
    %985 = vrot.lane.b32.xlu0 %v978, 126
    %v986 = vpop.permute.xlu0 %985
    %v989 = vmax.f32 %v979, %v984
    %v990 = vmax.f32 %v980, %v986
    %993 = vrot.lane.b32.xlu0 %v989, 1
    %v994 = vpop.permute.xlu0 %993
    %995 = vrot.lane.b32.xlu0 %v990, 1
    %v996 = vpop.permute.xlu0 %995
    %999 = vst.msk [vmem:[#allocation3 + $0x1] sm:$0xff] %vm932, %v994
    %1000 = vst.msk [vmem:[#allocation3 + $0x9] sm:$0xff] %vm932, %v996
    %v1001 = vld [vmem:[#allocation3] sm:$0xff]
    %v1002 = vld [vmem:[#allocation3 + $0x8] sm:$0xff]
    %v1003 = vmax.f32 %v1001, %v994
    %v1004 = vmax.f32 %v1002, %v996
    %v1005 = vld [vmem:[#allocation3 + $0x2] sm:$0xff]
    %v1006 = vld [vmem:[#allocation3 + $0xa] sm:$0xff]
    %v1007 = vmax.f32 %v1003, %v1005
    %v1008 = vmax.f32 %v1004, %v1006
    %1011 = vrot.lane.b32.xlu0 %v913, 1
    %v1012 = vpop.permute.xlu0 %1011
    %1013 = vrot.lane.b32.xlu0 %v914, 1
    %v1014 = vpop.permute.xlu0 %1013
    %1017 = vst.msk [vmem:[#allocation3 + $0x1] sm:$0xff] %vm932, %v1012
    %1018 = vst.msk [vmem:[#allocation3 + $0x9] sm:$0xff] %vm932, %v1014
    %v1019 = vld [vmem:[#allocation3 + $0x1] sm:$0xff]
    %v1020 = vld [vmem:[#allocation3 + $0x9] sm:$0xff]
    %v1021 = vmax.f32 %v1019, %v913
    %v1022 = vmax.f32 %v1020, %v914
    %1025 = vrot.lane.b32.xlu0 %v1019, 126
    %v1026 = vpop.permute.xlu0 %1025
    %1027 = vrot.lane.b32.xlu0 %v1020, 126
    %v1028 = vpop.permute.xlu0 %1027
    %v1031 = vmax.f32 %v1021, %v1026
    %v1032 = vmax.f32 %v1022, %v1028
    %1035 = vrot.lane.b32.xlu0 %v1031, 1
    %v1036 = vpop.permute.xlu0 %1035
    %1037 = vrot.lane.b32.xlu0 %v1032, 1
    %v1038 = vpop.permute.xlu0 %1037
    %1041 = vst.msk [vmem:[#allocation3 + $0x1] sm:$0xff] %vm932, %v1036
    %1042 = vst.msk [vmem:[#allocation3 + $0x9] sm:$0xff] %vm932, %v1038
    %v1043 = vld [vmem:[#allocation3] sm:$0xff]
    %v1044 = vld [vmem:[#allocation3 + $0x8] sm:$0xff]
    %v1045 = vmax.f32 %v1043, %v1036
    %v1046 = vmax.f32 %v1044, %v1038
    %v1047 = vld [vmem:[#allocation3 + $0x2] sm:$0xff]
    %v1048 = vld [vmem:[#allocation3 + $0xa] sm:$0xff]
    %v1049 = vmax.f32 %v1045, %v1047
    %v1050 = vmax.f32 %v1046, %v1048
    %1053 = vrot.lane.b32.xlu0 %v917, 1
    %v1054 = vpop.permute.xlu0 %1053
    %1055 = vrot.lane.b32.xlu0 %v918, 1
    %v1056 = vpop.permute.xlu0 %1055
    %1059 = vst.msk [vmem:[#allocation3 + $0x1] sm:$0xff] %vm932, %v1054
    %1060 = vst.msk [vmem:[#allocation3 + $0x9] sm:$0xff] %vm932, %v1056
    %v1061 = vld [vmem:[#allocation3 + $0x1] sm:$0xff]
    %v1062 = vld [vmem:[#allocation3 + $0x9] sm:$0xff]
    %v1063 = vmax.f32 %v1061, %v917
    %v1064 = vmax.f32 %v1062, %v918
    %1067 = vrot.lane.b32.xlu0 %v1061, 126
    %v1068 = vpop.permute.xlu0 %1067
    %1069 = vrot.lane.b32.xlu0 %v1062, 126
    %v1070 = vpop.permute.xlu0 %1069
    %v1073 = vmax.f32 %v1063, %v1068
    %v1074 = vmax.f32 %v1064, %v1070
    %1077 = vrot.lane.b32.xlu0 %v1073, 1
    %v1078 = vpop.permute.xlu0 %1077
    %1079 = vrot.lane.b32.xlu0 %v1074, 1
    %v1080 = vpop.permute.xlu0 %1079
    %1083 = vst.msk [vmem:[#allocation3 + $0x1] sm:$0xff] %vm932, %v1078
    %1084 = vst.msk [vmem:[#allocation3 + $0x9] sm:$0xff] %vm932, %v1080
    %v1085 = vld [vmem:[#allocation3] sm:$0xff]
    %v1086 = vld [vmem:[#allocation3 + $0x8] sm:$0xff]
    %v1087 = vmax.f32 %v1085, %v1078
    %v1088 = vmax.f32 %v1086, %v1080
    %v1089 = vld [vmem:[#allocation3 + $0x2] sm:$0xff]
    %v1090 = vld [vmem:[#allocation3 + $0xa] sm:$0xff]
    %v1091 = vmax.f32 %v1087, %v1089
    %v1092 = vmax.f32 %v1088, %v1090
    %v1093 = vmax.f32 %v965, %v1007
    %v1094 = vmax.f32 %v966, %v1008
    %1097 = vrot.lane.b32.xlu0 %v1093, 127
    %v1098 = vpop.permute.xlu0 %1097
    %1099 = vrot.lane.b32.xlu0 %v1094, 127
    %v1100 = vpop.permute.xlu0 %1099
    %1103 = vst.msk [vmem:[#allocation4] sm:$0xff] %vm92, %v1098
    %1104 = vst.msk [vmem:[#allocation4 + $0x8] sm:$0xff] %vm92, %v1100
    %vm1105 = vcmp.eq.f32.partialorder %v1093, %v927
    %vm1106 = vcmp.eq.f32.partialorder %v1094, %v929
    %vm1107 = vcmp.gt.f32.partialorder %v905, 0.001
    %vm1108 = vcmp.gt.f32.partialorder %v906, 0.001
    %v1109 = vsel %vm1107, 1, 0
    %v1110 = vsel %vm1108, 1, 0
    %1111 = vrot.lane.b32.xlu0 %v1109, 1
    %v1112 = vpop.permute.xlu0 %1111
    %1113 = vrot.lane.b32.xlu0 %v1110, 1
    %v1114 = vpop.permute.xlu0 %1113
    %vm1115 = vcmp.ne.s32.totalorder %v1112, 0
    %vm1116 = vcmp.ne.s32.totalorder %v1114, 0
    %vm1117 = vmand %vm1105, %vm1115
    %vm1118 = vmand %vm1106, %vm1116
    %v1119 = vsel %vm1117, 1, 0
    %v1120 = vsel %vm1118, 1, 0
    %1121 = vrot.lane.b32.xlu0 %v1119, 127
    %v1122 = vpop.permute.xlu0 %1121
    %1123 = vrot.lane.b32.xlu0 %v1120, 127
    %v1124 = vpop.permute.xlu0 %1123
    %1125 = vst.msk [vmem:[%s1] sm:$0xff] %vm92, %v1122
    %1126 = vst.msk [vmem:[%s1 + $0x8] sm:$0xff] %vm92, %v1124
    %v1127 = vmax.f32 %v1093, %v1049
    %v1128 = vmax.f32 %v1094, %v1050
    %1131 = vrot.lane.b32.xlu0 %v1127, 127
    %v1132 = vpop.permute.xlu0 %1131
    %1133 = vrot.lane.b32.xlu0 %v1128, 127
    %v1134 = vpop.permute.xlu0 %1133
    %s1137 = scalar_lea.vmem [#allocation4], 16
    %1138 = vst.msk [vmem:[%s1137] sm:$0xff] %vm92, %v1132
    %1139 = vst.msk [vmem:[%s1137 + $0x8] sm:$0xff] %vm92, %v1134
    %vm1140 = vcmp.eq.f32.partialorder %v1127, %v970
    %vm1141 = vcmp.eq.f32.partialorder %v1128, %v972
    %vm1142 = vcmp.gt.f32.partialorder %v909, 0.001
    %vm1143 = vcmp.gt.f32.partialorder %v910, 0.001
    %v1144 = vsel %vm1142, 1, 0
    %v1145 = vsel %vm1143, 1, 0
    %1146 = vrot.lane.b32.xlu0 %v1144, 1
    %v1147 = vpop.permute.xlu0 %1146
    %1148 = vrot.lane.b32.xlu0 %v1145, 1
    %v1149 = vpop.permute.xlu0 %1148
    %vm1150 = vcmp.ne.s32.totalorder %v1147, 0
    %vm1151 = vcmp.ne.s32.totalorder %v1149, 0
    %vm1152 = vmand %vm1140, %vm1150
    %vm1153 = vmand %vm1141, %vm1151
    %v1154 = vsel %vm1152, 1, 0
    %v1155 = vsel %vm1153, 1, 0
    %1156 = vrot.lane.b32.xlu0 %v1154, 127
    %v1157 = vpop.permute.xlu0 %1156
    %1158 = vrot.lane.b32.xlu0 %v1155, 127
    %v1159 = vpop.permute.xlu0 %1158
    %s1160 = scalar_lea.vmem %s1, 16
    %1161 = vst.msk [vmem:[%s1160] sm:$0xff] %vm92, %v1157
    %1162 = vst.msk [vmem:[%s1160 + $0x8] sm:$0xff] %vm92, %v1159
    %v1163 = vmax.f32 %v1049, %v1007
    %v1164 = vmax.f32 %v1050, %v1008
    %v1165 = vmax.f32 %v1163, %v1091
    %v1166 = vmax.f32 %v1164, %v1092
    %1169 = vrot.lane.b32.xlu0 %v1165, 127
    %v1170 = vpop.permute.xlu0 %1169
    %1171 = vrot.lane.b32.xlu0 %v1166, 127
    %v1172 = vpop.permute.xlu0 %1171
    %s1175 = scalar_lea.vmem [#allocation4], 32
    %1176 = vst.msk [vmem:[%s1175] sm:$0xff] %vm92, %v1170
    %1177 = vst.msk [vmem:[%s1175 + $0x8] sm:$0xff] %vm92, %v1172
    %vm1178 = vcmp.eq.f32.partialorder %v1165, %v1012
    %vm1179 = vcmp.eq.f32.partialorder %v1166, %v1014
    %vm1180 = vcmp.gt.f32.partialorder %v913, 0.001
    %vm1181 = vcmp.gt.f32.partialorder %v914, 0.001
    %v1182 = vsel %vm1180, 1, 0
    %v1183 = vsel %vm1181, 1, 0
    %1184 = vrot.lane.b32.xlu0 %v1182, 1
    %v1185 = vpop.permute.xlu0 %1184
    %1186 = vrot.lane.b32.xlu0 %v1183, 1
    %v1187 = vpop.permute.xlu0 %1186
    %vm1188 = vcmp.ne.s32.totalorder %v1185, 0
    %vm1189 = vcmp.ne.s32.totalorder %v1187, 0
    %vm1190 = vmand %vm1178, %vm1188
    %vm1191 = vmand %vm1179, %vm1189
    %v1192 = vsel %vm1190, 1, 0
    %v1193 = vsel %vm1191, 1, 0
    %1194 = vrot.lane.b32.xlu0 %v1192, 127
    %v1195 = vpop.permute.xlu0 %1194
    %1196 = vrot.lane.b32.xlu0 %v1193, 127
    %v1197 = vpop.permute.xlu0 %1196
    %s1198 = scalar_lea.vmem %s1, 32
    %1199 = vst.msk [vmem:[%s1198] sm:$0xff] %vm92, %v1195
    %1200 = vst.msk [vmem:[%s1198 + $0x8] sm:$0xff] %vm92, %v1197
    %v1201 = vmax.f32 %v1091, %v1049
    %v1202 = vmax.f32 %v1092, %v1050
    %1205 = vrot.lane.b32.xlu0 %v1201, 127
    %v1206 = vpop.permute.xlu0 %1205
    %1207 = vrot.lane.b32.xlu0 %v1202, 127
    %v1208 = vpop.permute.xlu0 %1207
    %s1211 = scalar_lea.vmem [#allocation4], 48
    %1212 = vst.msk [vmem:[%s1211] sm:$0xff] %vm92, %v1206
    %1213 = vst.msk [vmem:[%s1211 + $0x8] sm:$0xff] %vm92, %v1208
    %vm1214 = vcmp.eq.f32.partialorder %v1201, %v1054
    %vm1215 = vcmp.eq.f32.partialorder %v1202, %v1056
    %vm1216 = vcmp.gt.f32.partialorder %v917, 0.001
    %vm1217 = vcmp.gt.f32.partialorder %v918, 0.001
    %v1218 = vsel %vm1216, 1, 0
    %v1219 = vsel %vm1217, 1, 0
    %1220 = vrot.lane.b32.xlu0 %v1218, 1
    %v1221 = vpop.permute.xlu0 %1220
    %1222 = vrot.lane.b32.xlu0 %v1219, 1
    %v1223 = vpop.permute.xlu0 %1222
    %vm1224 = vcmp.ne.s32.totalorder %v1221, 0
    %vm1225 = vcmp.ne.s32.totalorder %v1223, 0
    %vm1226 = vmand %vm1214, %vm1224
    %vm1227 = vmand %vm1215, %vm1225
    %v1228 = vsel %vm1226, 1, 0
    %v1229 = vsel %vm1227, 1, 0
    %1230 = vrot.lane.b32.xlu0 %v1228, 127
    %v1231 = vpop.permute.xlu0 %1230
    %1232 = vrot.lane.b32.xlu0 %v1229, 127
    %v1233 = vpop.permute.xlu0 %1232
    %s1234 = scalar_lea.vmem %s1, 48
    %1235 = vst.msk [vmem:[%s1234] sm:$0xff] %vm92, %v1231
    %1236 = vst.msk [vmem:[%s1234 + $0x8] sm:$0xff] %vm92, %v1233
    // Predicated region
    $region6: #{dog_forward.1} parent=1 // pred_check
      _
    $region7: #{dog_forward.1} parent=1 // pred_check_branch
      %1238 = sbr.rel (0) target = $region9
    $region8: #{dog_forward.1} parent=1 // pred_region
      _
    $region9: #{dog_forward.1} parent=1 // pred_fallthru
      _
    // Predicated region
    $region10: #{dog_forward.1} parent=1 // pred_check
      _
    $region11: #{dog_forward.1} parent=1 // pred_check_branch
      %1240 = sbr.rel (0) target = $region13
    $region12: #{dog_forward.1} parent=1 // pred_region
      %s1242 = ssub.s32 1024, 1024
      %1243 = vsyncadd [#allocation5], %s1242
      %s1244 = sshll.u32 [#allocation4], 4
      %s1245 = int_to_ptr.vmem [resolvable:$true] %s1244
      %1250 = dma.vmem_to_hbm [thread:$0]  %s1245, 1024, %s2, [#allocation5], 128, 128, 8
    $region13: #{dog_forward.1} parent=1 // pred_fallthru
      _
    // Predicated region
    $region14: #{dog_forward.1} parent=1 // pred_check
      _
    $region15: #{dog_forward.1} parent=1 // pred_check_branch
      %1252 = sbr.rel (0) target = $region17
    $region16: #{dog_forward.1} parent=1 // pred_region
      _
    $region17: #{dog_forward.1} parent=1 // pred_fallthru
      _
    // Predicated region
    $region18: #{dog_forward.1} parent=1 // pred_check
      _
    $region19: #{dog_forward.1} parent=1 // pred_check_branch
      %1254 = sbr.rel (0) target = $region21
    $region20: #{dog_forward.1} parent=1 // pred_region
      %1255 = dma.done [#allocation5], 1024
    $region21: #{dog_forward.1} parent=1 // pred_fallthru
      _
    %1256 = vsyncpa [#allocation5], 1

</llo_original>
